<compile_context>
chip_gen: v7x
topology: tpu7x:2x2x1
jax: 0.10.0
libtpu: 0.0.40
codegen_flags: <defaults>
</compile_context>

<pallas_src>
import jax
import jax.numpy as jnp
from jax.experimental import pallas as pl
from jax.experimental.pallas import tpu as pltpu

LANE = 128


def _round_up(n, m):
    return ((n + m - 1) // m) * m


def _pad2(a, shape):
    return jnp.pad(a, [(0, s - d) for d, s in zip(a.shape, shape)])


def dqn_kernel(x_ref, w1_ref, b1_ref, w2_ref, b2_ref, w3_ref, b3_ref, o_ref):
    # One batch tile (TB rows); whole weight set is resident in VMEM.
    x = x_ref[...]                                                    # (TB, 16) bf16
    h1 = jnp.dot(x, w1_ref[...], preferred_element_type=jnp.float32) + b1_ref[...]
    h1 = jnp.maximum(h1, 0.0)                                         # ReLU, f32, lane-dense (128)
    h2 = jnp.dot(h1.astype(jnp.bfloat16), w2_ref[...],
                 preferred_element_type=jnp.float32) + b2_ref[...]
    h2 = jnp.maximum(h2, 0.0)                                         # ReLU, f32, lane-dense (128)
    o_ref[...] = (jnp.dot(h2.astype(jnp.bfloat16), w3_ref[...],
                          preferred_element_type=jnp.float32)
                  + b3_ref[...]).astype(o_ref.dtype)                  # (TB, 128) f32, unmasked store


def dqn_forward(x, params, *, block_batch=512):
    (w1, b1), (w2, b2), (w3, b3) = params
    B, f_in = x.shape
    n_out = w3.shape[1]

    # Zero-pad every output-feature (lane) dim to 128; cast matmul operands to bf16.
    h1p = _round_up(w1.shape[1], LANE)        # 64  -> 128
    h2p = _round_up(w2.shape[1], LANE)        # 8   -> 128
    outp = _round_up(n_out, LANE)             # 4   -> 128
    w1p = _pad2(w1, (f_in, h1p)).astype(jnp.bfloat16)
    b1p = _pad2(b1, (1, h1p))                                         # biases stay f32
    w2p = _pad2(w2, (h1p, h2p)).astype(jnp.bfloat16)
    b2p = _pad2(b2, (1, h2p))
    w3p = _pad2(w3, (h2p, outp)).astype(jnp.bfloat16)
    b3p = _pad2(b3, (1, outp))

    # Batch tiling: TB rows per grid step (>=8 for sublane alignment), pad batch.
    TB = min(block_batch, _round_up(B, 8))
    Bp = _round_up(B, TB)
    xb = x.astype(jnp.bfloat16)
    if Bp != B:
        xb = jnp.pad(xb, ((0, Bp - B), (0, 0)))

    out = pl.pallas_call(
        dqn_kernel,
        out_shape=jax.ShapeDtypeStruct((Bp, outp), jnp.float32),
        grid=(Bp // TB,),
        in_specs=[
            pl.BlockSpec((TB, f_in), lambda i: (i, 0)),      # x: pipelined over batch
            pl.BlockSpec((f_in, h1p), lambda i: (0, 0)),     # w1: resident
            pl.BlockSpec((1, h1p), lambda i: (0, 0)),        # b1
            pl.BlockSpec((h1p, h2p), lambda i: (0, 0)),      # w2
            pl.BlockSpec((1, h2p), lambda i: (0, 0)),        # b2
            pl.BlockSpec((h2p, outp), lambda i: (0, 0)),     # w3
            pl.BlockSpec((1, outp), lambda i: (0, 0)),       # b3
        ],
        out_specs=pl.BlockSpec((TB, outp), lambda i: (i, 0)),
        compiler_params=pltpu.CompilerParams(
            dimension_semantics=("parallel",)),              # dual-TC sharding on v7x
    )(xb, w1p, b1p, w2p, b2p, w3p, b3p)

    return out[:B, :n_out]


def init_linear(key, fan_in, fan_out):
    # Deterministic init mimicking PyTorch nn.Linear (uniform +/- 1/sqrt(fan_in)).
    kw, kb = jax.random.split(key)
    bound = 1.0 / jnp.sqrt(jnp.float32(fan_in))
    w = jax.random.uniform(kw, (fan_in, fan_out), jnp.float32, -bound, bound)
    b = jax.random.uniform(kb, (1, fan_out), jnp.float32, -bound, bound)
    return w, b


def reference_forward(x, params):
    # Mirrors the kernel's numerics: bf16 matmul operands, f32 accumulate/ReLU.
    (w1, b1), (w2, b2), (w3, b3) = params
    bf = jnp.bfloat16
    h1 = jnp.maximum(
        jnp.dot(x.astype(bf), w1.astype(bf), preferred_element_type=jnp.float32) + b1, 0.0)
    h2 = jnp.maximum(
        jnp.dot(h1.astype(bf), w2.astype(bf), preferred_element_type=jnp.float32) + b2, 0.0)
    return jnp.dot(h2.astype(bf), w3.astype(bf), preferred_element_type=jnp.float32) + b3


if __name__ == "__main__":
    input_states = 16      # FrozenLake 4x4 -> 16 states (one-hot)
    output_actions = 4     # L / D / R / U

    key = jax.random.PRNGKey(0)
    k_x, k_x2, k1, k2, k3 = jax.random.split(key, 5)

    params = (
        init_linear(k1, input_states, input_states * 4),        # fc1: 16 -> 64
        init_linear(k2, input_states * 4, output_actions * 2),  # fc2: 64 -> 8
        init_linear(k3, output_actions * 2, output_actions),    # fc3: 8  -> 4
    )

    # Case 1: replay-buffer sized batch -> 2 pipelined grid steps of 512 rows.
    batch = 1024
    x = jax.random.normal(k_x, (batch, input_states), jnp.float32)
    out = jax.block_until_ready(dqn_forward(x, params))
    ref = reference_forward(x, params)
    assert out.shape == (batch, output_actions)
    assert jnp.allclose(out, ref, atol=1e-3, rtol=1e-3), "mismatch vs reference (batch=1024)"

    # Case 2: tiny batch (single grid step, exercises batch-pad path).
    x_small = jax.random.normal(k_x2, (8, input_states), jnp.float32)
    out_small = jax.block_until_ready(dqn_forward(x_small, params))
    ref_small = reference_forward(x_small, params)
    assert out_small.shape == (8, output_actions)
    assert jnp.allclose(out_small, ref_small, atol=1e-3, rtol=1e-3), "mismatch vs reference (batch=8)"

    print("KERNEL_OK")
</pallas_src>

<mosaic_0001>
module attributes {stable_mosaic.version = 11 : i64} {
  func.func @dqn_kernel(%arg0: i32, %arg1: memref<512x16xbf16, #tpu.memory_space<vmem>>, %arg2: memref<16x128xbf16, #tpu.memory_space<vmem>>, %arg3: memref<1x128xf32, #tpu.memory_space<vmem>>, %arg4: memref<128x128xbf16, #tpu.memory_space<vmem>>, %arg5: memref<1x128xf32, #tpu.memory_space<vmem>>, %arg6: memref<128x128xbf16, #tpu.memory_space<vmem>>, %arg7: memref<1x128xf32, #tpu.memory_space<vmem>>, %arg8: memref<512x128xf32, #tpu.memory_space<vmem>>) attributes {dimension_semantics = [#tpu.dimension_semantics<parallel>], iteration_bounds = array<i64: 2>, scalar_prefetch = 0 : i64, scratch_operands = 0 : i64, tpu.core_type = #tpu.core_type<tc>, window_params = [{transform_indices = @transform_0, window_bounds = array<i64: 512, 16>}, {pipeline_mode = #tpu.pipeline_mode<synchronous>, transform_indices = @transform_1, window_bounds = array<i64: 16, 128>}, {pipeline_mode = #tpu.pipeline_mode<synchronous>, transform_indices = @transform_2, window_bounds = array<i64: 1, 128>}, {pipeline_mode = #tpu.pipeline_mode<synchronous>, transform_indices = @transform_3, window_bounds = array<i64: 128, 128>}, {pipeline_mode = #tpu.pipeline_mode<synchronous>, transform_indices = @transform_4, window_bounds = array<i64: 1, 128>}, {pipeline_mode = #tpu.pipeline_mode<synchronous>, transform_indices = @transform_5, window_bounds = array<i64: 128, 128>}, {pipeline_mode = #tpu.pipeline_mode<synchronous>, transform_indices = @transform_6, window_bounds = array<i64: 1, 128>}, {transform_indices = @transform_7, window_bounds = array<i64: 512, 128>}]} {
    %c0 = arith.constant 0 : index
    %c0_0 = arith.constant 0 : index
    %0 = vector.load %arg1[%c0, %c0_0] : memref<512x16xbf16, #tpu.memory_space<vmem>>, vector<512x16xbf16>
    %c0_1 = arith.constant 0 : index
    %c0_2 = arith.constant 0 : index
    %1 = vector.load %arg2[%c0_1, %c0_2] : memref<16x128xbf16, #tpu.memory_space<vmem>>, vector<16x128xbf16>
    %cst = arith.constant dense<0.000000e+00> : vector<512x128xf32>
    %2 = tpu.matmul %0, %1, %cst {dimension_numbers = #tpu.dot_dimension_numbers<[1], [0], [0], [1], [0, 0, 1, 1], [], []>} : vector<512x16xbf16>, vector<16x128xbf16>, vector<512x128xf32> -> vector<512x128xf32>
    %c0_3 = arith.constant 0 : index
    %c0_4 = arith.constant 0 : index
    %3 = vector.load %arg3[%c0_3, %c0_4] : memref<1x128xf32, #tpu.memory_space<vmem>>, vector<1x128xf32>
    %4 = vector.broadcast %3 : vector<1x128xf32> to vector<512x128xf32>
    %5 = arith.addf %2, %4 : vector<512x128xf32>
    %cst_5 = arith.constant 0.000000e+00 : f32
    %6 = vector.broadcast %cst_5 : f32 to vector<512x128xf32>
    %7 = arith.maximumf %5, %6 : vector<512x128xf32>
    %8 = arith.truncf %7 : vector<512x128xf32> to vector<512x128xbf16>
    %c0_6 = arith.constant 0 : index
    %c0_7 = arith.constant 0 : index
    %9 = vector.load %arg4[%c0_6, %c0_7] : memref<128x128xbf16, #tpu.memory_space<vmem>>, vector<128x128xbf16>
    %cst_8 = arith.constant dense<0.000000e+00> : vector<512x128xf32>
    %10 = tpu.matmul %8, %9, %cst_8 {dimension_numbers = #tpu.dot_dimension_numbers<[1], [0], [0], [1], [0, 0, 1, 1], [], []>} : vector<512x128xbf16>, vector<128x128xbf16>, vector<512x128xf32> -> vector<512x128xf32>
    %c0_9 = arith.constant 0 : index
    %c0_10 = arith.constant 0 : index
    %11 = vector.load %arg5[%c0_9, %c0_10] : memref<1x128xf32, #tpu.memory_space<vmem>>, vector<1x128xf32>
    %12 = vector.broadcast %11 : vector<1x128xf32> to vector<512x128xf32>
    %13 = arith.addf %10, %12 : vector<512x128xf32>
    %cst_11 = arith.constant 0.000000e+00 : f32
    %14 = vector.broadcast %cst_11 : f32 to vector<512x128xf32>
    %15 = arith.maximumf %13, %14 : vector<512x128xf32>
    %16 = arith.truncf %15 : vector<512x128xf32> to vector<512x128xbf16>
    %c0_12 = arith.constant 0 : index
    %c0_13 = arith.constant 0 : index
    %17 = vector.load %arg6[%c0_12, %c0_13] : memref<128x128xbf16, #tpu.memory_space<vmem>>, vector<128x128xbf16>
    %cst_14 = arith.constant dense<0.000000e+00> : vector<512x128xf32>
    %18 = tpu.matmul %16, %17, %cst_14 {dimension_numbers = #tpu.dot_dimension_numbers<[1], [0], [0], [1], [0, 0, 1, 1], [], []>} : vector<512x128xbf16>, vector<128x128xbf16>, vector<512x128xf32> -> vector<512x128xf32>
    %c0_15 = arith.constant 0 : index
    %c0_16 = arith.constant 0 : index
    %19 = vector.load %arg7[%c0_15, %c0_16] : memref<1x128xf32, #tpu.memory_space<vmem>>, vector<1x128xf32>
    %20 = vector.broadcast %19 : vector<1x128xf32> to vector<512x128xf32>
    %21 = arith.addf %18, %20 : vector<512x128xf32>
    %c0_17 = arith.constant 0 : index
    %c0_18 = arith.constant 0 : index
    %22 = vector.load %arg8[%c0_17, %c0_18] : memref<512x128xf32, #tpu.memory_space<vmem>>, vector<512x128xf32>
    tpu.vector_store %arg8[%c0_17, %c0_18], %21 {strides = array<i32>} : memref<512x128xf32, #tpu.memory_space<vmem>>, vector<512x128xf32>,
    return
  }
  func.func @transform_0(%arg0: i32) -> (i32, i32) {
    %c0_i32 = arith.constant 0 : i32
    %c0_i32_0 = arith.constant 0 : i32
    return %arg0, %c0_i32 : i32, i32
  }
  func.func @transform_1(%arg0: i32) -> (i32, i32) {
    %c0_i32 = arith.constant 0 : i32
    %c0_i32_0 = arith.constant 0 : i32
    %c0_i32_1 = arith.constant 0 : i32
    return %c0_i32, %c0_i32_0 : i32, i32
  }
  func.func @transform_2(%arg0: i32) -> (i32, i32) {
    %c0_i32 = arith.constant 0 : i32
    %c0_i32_0 = arith.constant 0 : i32
    %c0_i32_1 = arith.constant 0 : i32
    return %c0_i32, %c0_i32_0 : i32, i32
  }
  func.func @transform_3(%arg0: i32) -> (i32, i32) {
    %c0_i32 = arith.constant 0 : i32
    %c0_i32_0 = arith.constant 0 : i32
    %c0_i32_1 = arith.constant 0 : i32
    return %c0_i32, %c0_i32_0 : i32, i32
  }
  func.func @transform_4(%arg0: i32) -> (i32, i32) {
    %c0_i32 = arith.constant 0 : i32
    %c0_i32_0 = arith.constant 0 : i32
    %c0_i32_1 = arith.constant 0 : i32
    return %c0_i32, %c0_i32_0 : i32, i32
  }
  func.func @transform_5(%arg0: i32) -> (i32, i32) {
    %c0_i32 = arith.constant 0 : i32
    %c0_i32_0 = arith.constant 0 : i32
    %c0_i32_1 = arith.constant 0 : i32
    return %c0_i32, %c0_i32_0 : i32, i32
  }
  func.func @transform_6(%arg0: i32) -> (i32, i32) {
    %c0_i32 = arith.constant 0 : i32
    %c0_i32_0 = arith.constant 0 : i32
    %c0_i32_1 = arith.constant 0 : i32
    return %c0_i32, %c0_i32_0 : i32, i32
  }
  func.func @transform_7(%arg0: i32) -> (i32, i32) {
    %c0_i32 = arith.constant 0 : i32
    %c0_i32_0 = arith.constant 0 : i32
    return %arg0, %c0_i32 : i32, i32
  }
}

</mosaic_0001>

<llo_original>
// kernel: tpu_custom_call.1
$region0: #{tpu_custom_call.1}
  #allocation0 [shape = 'u32[]', space=smem, size = 0x4, offset = 0x4, fixed_abs, tag = 'smem constant byte address 0x4 - core index']
  #allocation1 [shape = 'u32[144,128]{1,0:T(1,128)}', space=vmem, size = 0x12000, scoped, tag = 'internal scratch']
  %s0 = inlined_call_operand.vmem [shape: bf16[1024,16], index: 0, kind: input, shape index: {}]
  %s1 = inlined_call_operand.vmem [shape: bf16[16,128], index: 1, kind: input, shape index: {}]
  %s2 = inlined_call_operand.vmem [shape: f32[1,128], index: 2, kind: input, shape index: {}]
  %s3 = inlined_call_operand.vmem [shape: bf16[128,128], index: 3, kind: input, shape index: {}]
  %s4 = inlined_call_operand.vmem [shape: f32[1,128], index: 4, kind: input, shape index: {}]
  %s5 = inlined_call_operand.vmem [shape: bf16[128,128], index: 5, kind: input, shape index: {}]
  %s6 = inlined_call_operand.vmem [shape: f32[1,128], index: 6, kind: input, shape index: {}]
  %s7 = inlined_call_operand.hbm [shape: f32[1024,128], index: 7, kind: output, shape index: {}]
  %s8 = sld [smem:[#allocation0]]
  $region61: #{tpu_custom_call.1} parent=0
    _
  %s10 = ssub.s32 1, %s8
  %s11 = scalar_select 0, %s10, %s8
  $region1: #{tpu_custom_call.1} parent=0
    #allocation2 [shape = 'u8[524288]{0}', space=vmem, size = 0x80000, scoped, tag = 'output window, operand 0']
    #allocation3 [shape = 's32[2]{0}', space=sflag, size = 0x8, scoped, tag = 'scoped memory for tpu_custom_call.1']
    %12 = vsyncpa [#allocation3], 0
    %s13 = scalar_lea.sflag [#allocation3], 1
    %14 = vsyncpa %s13, 0
    loop: start=0, step=1, limit=4
    $region2: #{tpu_custom_call.1} parent=1 // loop_pre_header
      _
    $region3: #{tpu_custom_call.1} parent=1 // loop_header
      %s16 = sphi 0, %s20
      %p17 = scmp.ge.s32.totalorder %s16, 4
      %s26 = sphi 0, %s28
      %s29 = sphi 0, %s26
      %s30 = sphi 0, %s29
      %s46 = sphi 0, %s30
      %s50 = sphi 0, %s50
      %s52 = sphi 0, %s50
      %s53 = sphi 0, %s52
      %s67 = sphi 0, %s53
      %s71 = sphi 0, %s71
      %s73 = sphi 0, %s71
      %s74 = sphi 0, %s73
      %s88 = sphi 0, %s74
      %s92 = sphi 0, %s92
      %s94 = sphi 0, %s92
      %s95 = sphi 0, %s94
      %s109 = sphi 0, %s95
      %s113 = sphi 0, %s113
      %s115 = sphi 0, %s113
      %s116 = sphi 0, %s115
      %s130 = sphi 0, %s116
      %s134 = sphi 0, %s134
      %s136 = sphi 0, %s134
      %s137 = sphi 0, %s136
      %s151 = sphi 0, %s137
      %s155 = sphi 0, %s155
      %s157 = sphi 0, %s155
      %s158 = sphi 0, %s157
      %s172 = sphi 0, %s158
      %s178 = sphi 0, %s180
      %s181 = sphi 0, %s178
      %s182 = sphi 0, %s181
      %s198 = sphi 0, %s182
    $region4: #{tpu_custom_call.1} parent=1 // loop_header_branch
      %19 = sbr.rel (%p17) target = $region8
    $region5: #{tpu_custom_call.1} parent=1 // loop_body
      %s21 = ssub.s32 %s16, 1
      %s22 = ssub.s32 %s16, 2
      %s23 = sadd.s32 %s16, 1
      %s24 = ssub.s32 %s16, %s23
      %p25 = scmp.eq.s32.totalorder %s24, 0
      %s27 = sadd.s32 %s26, 1
      %s28 = scalar_select %p25, %s26, %s27
      %p31 = pneg %p25
      %p32 = scmp.eq.s32.totalorder %s16, 1
      %p33 = por %p31, %p32
      %p34 = scmp.ne.s32.totalorder %s26, %s29
      %p35 = scmp.eq.s32.totalorder %s16, 0
      %p36 = por %p34, %p35
      %p37 = scmp.ne.s32.totalorder %s26, %s29
      %p38 = scmp.eq.s32.totalorder %s21, 1
      %p39 = por %p37, %p38
      %p40 = scmp.ne.s32.totalorder %s29, %s30
      %p41 = scmp.eq.s32.totalorder %s21, 0
      %p42 = por %p40, %p41
      %p43 = scmp.ne.s32.totalorder %s29, %s30
      %p44 = scmp.eq.s32.totalorder %s22, 1
      %p45 = por %p43, %p44
      %p47 = scmp.ne.s32.totalorder %s30, %s46
      %p48 = scmp.eq.s32.totalorder %s22, 0
      %p49 = por %p47, %p48
      %s51 = sadd.s32 %s50, 1
      %p54 = scmp.eq.s32.totalorder %s16, 1
      %p55 = scmp.ne.s32.totalorder %s50, %s52
      %p56 = scmp.eq.s32.totalorder %s16, 0
      %p57 = por %p55, %p56
      %p58 = scmp.ne.s32.totalorder %s50, %s52
      %p59 = scmp.eq.s32.totalorder %s21, 1
      %p60 = por %p58, %p59
      %p61 = scmp.ne.s32.totalorder %s52, %s53
      %p62 = scmp.eq.s32.totalorder %s21, 0
      %p63 = por %p61, %p62
      %p64 = scmp.ne.s32.totalorder %s52, %s53
      %p65 = scmp.eq.s32.totalorder %s22, 1
      %p66 = por %p64, %p65
      %p68 = scmp.ne.s32.totalorder %s53, %s67
      %p69 = scmp.eq.s32.totalorder %s22, 0
      %p70 = por %p68, %p69
      %s72 = sadd.s32 %s71, 1
      %p75 = scmp.eq.s32.totalorder %s16, 1
      %p76 = scmp.ne.s32.totalorder %s71, %s73
      %p77 = scmp.eq.s32.totalorder %s16, 0
      %p78 = por %p76, %p77
      %p79 = scmp.ne.s32.totalorder %s71, %s73
      %p80 = scmp.eq.s32.totalorder %s21, 1
      %p81 = por %p79, %p80
      %p82 = scmp.ne.s32.totalorder %s73, %s74
      %p83 = scmp.eq.s32.totalorder %s21, 0
      %p84 = por %p82, %p83
      %p85 = scmp.ne.s32.totalorder %s73, %s74
      %p86 = scmp.eq.s32.totalorder %s22, 1
      %p87 = por %p85, %p86
      %p89 = scmp.ne.s32.totalorder %s74, %s88
      %p90 = scmp.eq.s32.totalorder %s22, 0
      %p91 = por %p89, %p90
      %s93 = sadd.s32 %s92, 1
      %p96 = scmp.eq.s32.totalorder %s16, 1
      %p97 = scmp.ne.s32.totalorder %s92, %s94
      %p98 = scmp.eq.s32.totalorder %s16, 0
      %p99 = por %p97, %p98
      %p100 = scmp.ne.s32.totalorder %s92, %s94
      %p101 = scmp.eq.s32.totalorder %s21, 1
      %p102 = por %p100, %p101
      %p103 = scmp.ne.s32.totalorder %s94, %s95
      %p104 = scmp.eq.s32.totalorder %s21, 0
      %p105 = por %p103, %p104
      %p106 = scmp.ne.s32.totalorder %s94, %s95
      %p107 = scmp.eq.s32.totalorder %s22, 1
      %p108 = por %p106, %p107
      %p110 = scmp.ne.s32.totalorder %s95, %s109
      %p111 = scmp.eq.s32.totalorder %s22, 0
      %p112 = por %p110, %p111
      %s114 = sadd.s32 %s113, 1
      %p117 = scmp.eq.s32.totalorder %s16, 1
      %p118 = scmp.ne.s32.totalorder %s113, %s115
      %p119 = scmp.eq.s32.totalorder %s16, 0
      %p120 = por %p118, %p119
      %p121 = scmp.ne.s32.totalorder %s113, %s115
      %p122 = scmp.eq.s32.totalorder %s21, 1
      %p123 = por %p121, %p122
      %p124 = scmp.ne.s32.totalorder %s115, %s116
      %p125 = scmp.eq.s32.totalorder %s21, 0
      %p126 = por %p124, %p125
      %p127 = scmp.ne.s32.totalorder %s115, %s116
      %p128 = scmp.eq.s32.totalorder %s22, 1
      %p129 = por %p127, %p128
      %p131 = scmp.ne.s32.totalorder %s116, %s130
      %p132 = scmp.eq.s32.totalorder %s22, 0
      %p133 = por %p131, %p132
      %s135 = sadd.s32 %s134, 1
      %p138 = scmp.eq.s32.totalorder %s16, 1
      %p139 = scmp.ne.s32.totalorder %s134, %s136
      %p140 = scmp.eq.s32.totalorder %s16, 0
      %p141 = por %p139, %p140
      %p142 = scmp.ne.s32.totalorder %s134, %s136
      %p143 = scmp.eq.s32.totalorder %s21, 1
      %p144 = por %p142, %p143
      %p145 = scmp.ne.s32.totalorder %s136, %s137
      %p146 = scmp.eq.s32.totalorder %s21, 0
      %p147 = por %p145, %p146
      %p148 = scmp.ne.s32.totalorder %s136, %s137
      %p149 = scmp.eq.s32.totalorder %s22, 1
      %p150 = por %p148, %p149
      %p152 = scmp.ne.s32.totalorder %s137, %s151
      %p153 = scmp.eq.s32.totalorder %s22, 0
      %p154 = por %p152, %p153
      %s156 = sadd.s32 %s155, 1
      %p159 = scmp.eq.s32.totalorder %s16, 1
      %p160 = scmp.ne.s32.totalorder %s155, %s157
      %p161 = scmp.eq.s32.totalorder %s16, 0
      %p162 = por %p160, %p161
      %p163 = scmp.ne.s32.totalorder %s155, %s157
      %p164 = scmp.eq.s32.totalorder %s21, 1
      %p165 = por %p163, %p164
      %p166 = scmp.ne.s32.totalorder %s157, %s158
      %p167 = scmp.eq.s32.totalorder %s21, 0
      %p168 = por %p166, %p167
      %p169 = scmp.ne.s32.totalorder %s157, %s158
      %p170 = scmp.eq.s32.totalorder %s22, 1
      %p171 = por %p169, %p170
      %p173 = scmp.ne.s32.totalorder %s158, %s172
      %p174 = scmp.eq.s32.totalorder %s22, 0
      %p175 = por %p173, %p174
      %s176 = ssub.s32 %s16, %s23
      %p177 = scmp.eq.s32.totalorder %s176, 0
      %s179 = sadd.s32 %s178, 1
      %s180 = scalar_select %p177, %s178, %s179
      %p183 = pneg %p177
      %p184 = scmp.eq.s32.totalorder %s16, 1
      %p185 = por %p183, %p184
      %p186 = scmp.ne.s32.totalorder %s178, %s181
      %p187 = scmp.eq.s32.totalorder %s16, 0
      %p188 = por %p186, %p187
      %p189 = scmp.ne.s32.totalorder %s178, %s181
      %p190 = scmp.eq.s32.totalorder %s21, 1
      %p191 = por %p189, %p190
      %p192 = scmp.ne.s32.totalorder %s181, %s182
      %p193 = scmp.eq.s32.totalorder %s21, 0
      %p194 = por %p192, %p193
      %p195 = scmp.ne.s32.totalorder %s181, %s182
      %p196 = scmp.eq.s32.totalorder %s22, 1
      %p197 = por %p195, %p196
      %p199 = scmp.ne.s32.totalorder %s182, %s198
      %p200 = scmp.eq.s32.totalorder %s22, 0
      %p201 = por %p199, %p200
      %p202 = scmp.le.s32.totalorder 1, %s16
      %p203 = scmp.lt.s32.totalorder %s16, 3
      %p204 = pnand %p202, %p203
      %p205 = pneg %p204
      // Predicated region
      $region9: #{tpu_custom_call.1} parent=5 // pred_check
        _
      $region10: #{tpu_custom_call.1} parent=5 // pred_check_branch
        %207 = sbr.rel (%p204) target = $region12
      $region11: #{tpu_custom_call.1} parent=5 // pred_region
        %s208 = ssub.s32 %s16, 1
        // Predicated region
        $region13: #{tpu_custom_call.1} parent=11 // pred_check
          %p209 = pneg %p63
        $region14: #{tpu_custom_call.1} parent=11 // pred_check_branch
          %211 = sbr.rel (%p209) target = $region16
        $region15: #{tpu_custom_call.1} parent=11 // pred_region
          _
        $region16: #{tpu_custom_call.1} parent=11 // pred_fallthru
          _
        // Predicated region
        $region17: #{tpu_custom_call.1} parent=11 // pred_check
          %p212 = pneg %p84
        $region18: #{tpu_custom_call.1} parent=11 // pred_check_branch
          %214 = sbr.rel (%p212) target = $region20
        $region19: #{tpu_custom_call.1} parent=11 // pred_region
          _
        $region20: #{tpu_custom_call.1} parent=11 // pred_fallthru
          _
        // Predicated region
        $region21: #{tpu_custom_call.1} parent=11 // pred_check
          %p215 = pneg %p105
        $region22: #{tpu_custom_call.1} parent=11 // pred_check_branch
          %217 = sbr.rel (%p215) target = $region24
        $region23: #{tpu_custom_call.1} parent=11 // pred_region
          _
        $region24: #{tpu_custom_call.1} parent=11 // pred_fallthru
          _
        // Predicated region
        $region25: #{tpu_custom_call.1} parent=11 // pred_check
          %p218 = pneg %p126
        $region26: #{tpu_custom_call.1} parent=11 // pred_check_branch
          %220 = sbr.rel (%p218) target = $region28
        $region27: #{tpu_custom_call.1} parent=11 // pred_region
          _
        $region28: #{tpu_custom_call.1} parent=11 // pred_fallthru
          _
        // Predicated region
        $region29: #{tpu_custom_call.1} parent=11 // pred_check
          %p221 = pneg %p147
        $region30: #{tpu_custom_call.1} parent=11 // pred_check_branch
          %223 = sbr.rel (%p221) target = $region32
        $region31: #{tpu_custom_call.1} parent=11 // pred_region
          _
        $region32: #{tpu_custom_call.1} parent=11 // pred_fallthru
          _
        // Predicated region
        $region33: #{tpu_custom_call.1} parent=11 // pred_check
          %p224 = pneg %p168
        $region34: #{tpu_custom_call.1} parent=11 // pred_check_branch
          %226 = sbr.rel (%p224) target = $region36
        $region35: #{tpu_custom_call.1} parent=11 // pred_region
          _
        $region36: #{tpu_custom_call.1} parent=11 // pred_fallthru
          _
      $region12: #{tpu_custom_call.1} parent=5 // pred_fallthru
        _
      %p227 = scmp.lt.s32.totalorder %s16, 2
      // Predicated region
      $region37: #{tpu_custom_call.1} parent=5 // pred_check
        %p228 = pneg %p227
      $region38: #{tpu_custom_call.1} parent=5 // pred_check_branch
        %230 = sbr.rel (%p228) target = $region40
      $region39: #{tpu_custom_call.1} parent=5 // pred_region
        // Predicated region
        $region41: #{tpu_custom_call.1} parent=39 // pred_check
          %p231 = pneg %p36
        $region42: #{tpu_custom_call.1} parent=39 // pred_check_branch
          %233 = sbr.rel (%p231) target = $region44
        $region43: #{tpu_custom_call.1} parent=39 // pred_region
          %s234 = smul.u32 64, %s16
          %p235 = scmp.lt.s32.totalorder %s234, 127
          %s236 = scalar_select %p235, %s234, 127
          %s237 = smul.addr %s236, 4
          %s238 = scalar_lea.vmem %s0, %s237
          %s239 = smul.u32 64, %s16
        $region44: #{tpu_custom_call.1} parent=39 // pred_fallthru
          _
      $region40: #{tpu_custom_call.1} parent=5 // pred_fallthru
        _
      %p240 = scmp.le.s32.totalorder 1, %s16
      %p241 = scmp.lt.s32.totalorder %s16, 3
      %p242 = pnand %p240, %p241
      %p243 = pneg %p242
      // Predicated region
      $region45: #{tpu_custom_call.1} parent=5 // pred_check
        _
      $region46: #{tpu_custom_call.1} parent=5 // pred_check_branch
        %245 = sbr.rel (%p242) target = $region48
      $region47: #{tpu_custom_call.1} parent=5 // pred_region
        %s246 = ssub.s32 %s16, 1
        %s247 = smul.u32 64, %s21
        %p248 = scmp.lt.s32.totalorder %s247, 127
        %s249 = scalar_select %p248, %s247, 127
        %s250 = smul.addr %s249, 4
        %s251 = scalar_lea.vmem %s0, %s250
        %p252 = pneg %p42
        %p253 = pneg %p39
        %p254 = pneg %p63
        %p255 = pneg %p60
        %p256 = pneg %p84
        %p257 = pneg %p81
        %p258 = pneg %p105
        %p259 = pneg %p102
        %p260 = pneg %p126
        %p261 = pneg %p123
        %p262 = pneg %p147
        %p263 = pneg %p144
        %p264 = pneg %p168
        %p265 = pneg %p165
        %p266 = pneg %p194
        %p267 = pneg %p191
        %s268 = sand.u32 %s181, 1
        %s269 = scalar_lea.sflag [#allocation3], %s268
        %s270 = sand.u32 %s181, 1
        %s271 = smul.addr %s270, 512
        %s272 = scalar_lea.vmem [#allocation2], %s271
        %s273 = smul.u32 64, %s21
        %p274 = scmp.lt.s32.totalorder %s273, 127
        %s275 = scalar_select %p274, %s273, 127
        %s276 = smul.addr %s275, 4
        %s277 = scalar_lea.vmem %s0, %s276
        %s278 = smul.u32 64, %s21
        %s279 = smul.u32 64, %s21
        %v281 = vld [vmem:[%s277] sm:$0xf]
        %v282 = vld [vmem:[%s277 + $0x4] sm:$0xf]
        %v283 = vld [vmem:[%s277 + $0x8] sm:$0xf]
        %v284 = vld [vmem:[%s277 + $0xc] sm:$0xf]
        %v285 = vld [vmem:[%s277 + $0x10] sm:$0xf]
        %v286 = vld [vmem:[%s277 + $0x14] sm:$0xf]
        %v287 = vld [vmem:[%s277 + $0x18] sm:$0xf]
        %v288 = vld [vmem:[%s277 + $0x1c] sm:$0xf]
        %v289 = vld [vmem:[%s277 + $0x20] sm:$0xf]
        %v290 = vld [vmem:[%s277 + $0x24] sm:$0xf]
        %v291 = vld [vmem:[%s277 + $0x28] sm:$0xf]
        %v292 = vld [vmem:[%s277 + $0x2c] sm:$0xf]
        %v293 = vld [vmem:[%s277 + $0x30] sm:$0xf]
        %v294 = vld [vmem:[%s277 + $0x34] sm:$0xf]
        %v295 = vld [vmem:[%s277 + $0x38] sm:$0xf]
        %v296 = vld [vmem:[%s277 + $0x3c] sm:$0xf]
        %v297 = vld [vmem:[%s277 + $0x40] sm:$0xf]
        %v298 = vld [vmem:[%s277 + $0x44] sm:$0xf]
        %v299 = vld [vmem:[%s277 + $0x48] sm:$0xf]
        %v300 = vld [vmem:[%s277 + $0x4c] sm:$0xf]
        %v301 = vld [vmem:[%s277 + $0x50] sm:$0xf]
        %v302 = vld [vmem:[%s277 + $0x54] sm:$0xf]
        %v303 = vld [vmem:[%s277 + $0x58] sm:$0xf]
        %v304 = vld [vmem:[%s277 + $0x5c] sm:$0xf]
        %v305 = vld [vmem:[%s277 + $0x60] sm:$0xf]
        %v306 = vld [vmem:[%s277 + $0x64] sm:$0xf]
        %v307 = vld [vmem:[%s277 + $0x68] sm:$0xf]
        %v308 = vld [vmem:[%s277 + $0x6c] sm:$0xf]
        %v309 = vld [vmem:[%s277 + $0x70] sm:$0xf]
        %v310 = vld [vmem:[%s277 + $0x74] sm:$0xf]
        %v311 = vld [vmem:[%s277 + $0x78] sm:$0xf]
        %v312 = vld [vmem:[%s277 + $0x7c] sm:$0xf]
        %v313 = vld [vmem:[%s277 + $0x80] sm:$0xf]
        %v314 = vld [vmem:[%s277 + $0x84] sm:$0xf]
        %v315 = vld [vmem:[%s277 + $0x88] sm:$0xf]
        %v316 = vld [vmem:[%s277 + $0x8c] sm:$0xf]
        %v317 = vld [vmem:[%s277 + $0x90] sm:$0xf]
        %v318 = vld [vmem:[%s277 + $0x94] sm:$0xf]
        %v319 = vld [vmem:[%s277 + $0x98] sm:$0xf]
        %v320 = vld [vmem:[%s277 + $0x9c] sm:$0xf]
        %v321 = vld [vmem:[%s277 + $0xa0] sm:$0xf]
        %v322 = vld [vmem:[%s277 + $0xa4] sm:$0xf]
        %v323 = vld [vmem:[%s277 + $0xa8] sm:$0xf]
        %v324 = vld [vmem:[%s277 + $0xac] sm:$0xf]
        %v325 = vld [vmem:[%s277 + $0xb0] sm:$0xf]
        %v326 = vld [vmem:[%s277 + $0xb4] sm:$0xf]
        %v327 = vld [vmem:[%s277 + $0xb8] sm:$0xf]
        %v328 = vld [vmem:[%s277 + $0xbc] sm:$0xf]
        %v329 = vld [vmem:[%s277 + $0xc0] sm:$0xf]
        %v330 = vld [vmem:[%s277 + $0xc4] sm:$0xf]
        %v331 = vld [vmem:[%s277 + $0xc8] sm:$0xf]
        %v332 = vld [vmem:[%s277 + $0xcc] sm:$0xf]
        %v333 = vld [vmem:[%s277 + $0xd0] sm:$0xf]
        %v334 = vld [vmem:[%s277 + $0xd4] sm:$0xf]
        %v335 = vld [vmem:[%s277 + $0xd8] sm:$0xf]
        %v336 = vld [vmem:[%s277 + $0xdc] sm:$0xf]
        %v337 = vld [vmem:[%s277 + $0xe0] sm:$0xf]
        %v338 = vld [vmem:[%s277 + $0xe4] sm:$0xf]
        %v339 = vld [vmem:[%s277 + $0xe8] sm:$0xf]
        %v340 = vld [vmem:[%s277 + $0xec] sm:$0xf]
        %v341 = vld [vmem:[%s277 + $0xf0] sm:$0xf]
        %v342 = vld [vmem:[%s277 + $0xf4] sm:$0xf]
        %v343 = vld [vmem:[%s277 + $0xf8] sm:$0xf]
        %v344 = vld [vmem:[%s277 + $0xfc] sm:$0xf]
        %v345 = vld [vmem:[%s1] sm:$0xf]
        %v346 = vld [vmem:[%s1 + $0x4] sm:$0xf]
        %v347 = vld [vmem:[%s2] sm:$0x1]
        %v349 = vlaneseq
        %v350 = vshrl.u32 %v349, 7
        %v351 = vsub.s32 0, %v350
        %v352 = vrot.slane %v347, %v351
        %v418 = vunpack.c.l.b16 %v281
        %v419 = vunpack.c.l.b16 %v282
        %v420 = vunpack.c.l.b16 %v283
        %v421 = vunpack.c.l.b16 %v284
        %v422 = vunpack.c.l.b16 %v285
        %v423 = vunpack.c.l.b16 %v286
        %v424 = vunpack.c.l.b16 %v287
        %v425 = vunpack.c.l.b16 %v288
        %v426 = vunpack.c.l.b16 %v289
        %v427 = vunpack.c.l.b16 %v290
        %v428 = vunpack.c.l.b16 %v291
        %v429 = vunpack.c.l.b16 %v292
        %v430 = vunpack.c.l.b16 %v293
        %v431 = vunpack.c.l.b16 %v294
        %v432 = vunpack.c.l.b16 %v295
        %v433 = vunpack.c.l.b16 %v296
        %v434 = vunpack.c.l.b16 %v297
        %v435 = vunpack.c.l.b16 %v298
        %v436 = vunpack.c.l.b16 %v299
        %v437 = vunpack.c.l.b16 %v300
        %v438 = vunpack.c.l.b16 %v301
        %v439 = vunpack.c.l.b16 %v302
        %v440 = vunpack.c.l.b16 %v303
        %v441 = vunpack.c.l.b16 %v304
        %v442 = vunpack.c.l.b16 %v305
        %v443 = vunpack.c.l.b16 %v306
        %v444 = vunpack.c.l.b16 %v307
        %v445 = vunpack.c.l.b16 %v308
        %v446 = vunpack.c.l.b16 %v309
        %v447 = vunpack.c.l.b16 %v310
        %v448 = vunpack.c.l.b16 %v311
        %v449 = vunpack.c.l.b16 %v312
        %v450 = vunpack.c.l.b16 %v313
        %v451 = vunpack.c.l.b16 %v314
        %v452 = vunpack.c.l.b16 %v315
        %v453 = vunpack.c.l.b16 %v316
        %v454 = vunpack.c.l.b16 %v317
        %v455 = vunpack.c.l.b16 %v318
        %v456 = vunpack.c.l.b16 %v319
        %v457 = vunpack.c.l.b16 %v320
        %v458 = vunpack.c.l.b16 %v321
        %v459 = vunpack.c.l.b16 %v322
        %v460 = vunpack.c.l.b16 %v323
        %v461 = vunpack.c.l.b16 %v324
        %v462 = vunpack.c.l.b16 %v325
        %v463 = vunpack.c.l.b16 %v326
        %v464 = vunpack.c.l.b16 %v327
        %v465 = vunpack.c.l.b16 %v328
        %v466 = vunpack.c.l.b16 %v329
        %v467 = vunpack.c.l.b16 %v330
        %v468 = vunpack.c.l.b16 %v331
        %v469 = vunpack.c.l.b16 %v332
        %v470 = vunpack.c.l.b16 %v333
        %v471 = vunpack.c.l.b16 %v334
        %v472 = vunpack.c.l.b16 %v335
        %v473 = vunpack.c.l.b16 %v336
        %v474 = vunpack.c.l.b16 %v337
        %v475 = vunpack.c.l.b16 %v338
        %v476 = vunpack.c.l.b16 %v339
        %v477 = vunpack.c.l.b16 %v340
        %v478 = vunpack.c.l.b16 %v341
        %v479 = vunpack.c.l.b16 %v342
        %v480 = vunpack.c.l.b16 %v343
        %v481 = vunpack.c.l.b16 %v344
        %v482 = vpack.c.b16 %v419, %v418
        %v483 = vpack.c.b16 %v421, %v420
        %v484 = vpack.c.b16 %v423, %v422
        %v485 = vpack.c.b16 %v425, %v424
        %v486 = vpack.c.b16 %v427, %v426
        %v487 = vpack.c.b16 %v429, %v428
        %v488 = vpack.c.b16 %v431, %v430
        %v489 = vpack.c.b16 %v433, %v432
        %v490 = vpack.c.b16 %v435, %v434
        %v491 = vpack.c.b16 %v437, %v436
        %v492 = vpack.c.b16 %v439, %v438
        %v493 = vpack.c.b16 %v441, %v440
        %v494 = vpack.c.b16 %v443, %v442
        %v495 = vpack.c.b16 %v445, %v444
        %v496 = vpack.c.b16 %v447, %v446
        %v497 = vpack.c.b16 %v449, %v448
        %v498 = vpack.c.b16 %v451, %v450
        %v499 = vpack.c.b16 %v453, %v452
        %v500 = vpack.c.b16 %v455, %v454
        %v501 = vpack.c.b16 %v457, %v456
        %v502 = vpack.c.b16 %v459, %v458
        %v503 = vpack.c.b16 %v461, %v460
        %v504 = vpack.c.b16 %v463, %v462
        %v505 = vpack.c.b16 %v465, %v464
        %v506 = vpack.c.b16 %v467, %v466
        %v507 = vpack.c.b16 %v469, %v468
        %v508 = vpack.c.b16 %v471, %v470
        %v509 = vpack.c.b16 %v473, %v472
        %v510 = vpack.c.b16 %v475, %v474
        %v511 = vpack.c.b16 %v477, %v476
        %v512 = vpack.c.b16 %v479, %v478
        %v513 = vpack.c.b16 %v481, %v480
        %v516 = vunpack.c.l.b16 %v345
        %v517 = vunpack.c.l.b16 %v346
        %v518 = vpack.c.b16 %v517, %v516
        %vm520 = vcmask 130048
        %v522 = vsel %vm520, %v482, 0
        %v525 = vsel %vm520, %v483, 0
        %v528 = vsel %vm520, %v484, 0
        %v531 = vsel %vm520, %v485, 0
        %v534 = vsel %vm520, %v486, 0
        %v537 = vsel %vm520, %v487, 0
        %v540 = vsel %vm520, %v488, 0
        %v543 = vsel %vm520, %v489, 0
        %v546 = vsel %vm520, %v490, 0
        %v549 = vsel %vm520, %v491, 0
        %v552 = vsel %vm520, %v492, 0
        %v555 = vsel %vm520, %v493, 0
        %v558 = vsel %vm520, %v494, 0
        %v561 = vsel %vm520, %v495, 0
        %v564 = vsel %vm520, %v496, 0
        %v567 = vsel %vm520, %v497, 0
        %v570 = vsel %vm520, %v498, 0
        %v573 = vsel %vm520, %v499, 0
        %v576 = vsel %vm520, %v500, 0
        %v579 = vsel %vm520, %v501, 0
        %v582 = vsel %vm520, %v502, 0
        %v585 = vsel %vm520, %v503, 0
        %v588 = vsel %vm520, %v504, 0
        %v591 = vsel %vm520, %v505, 0
        %v594 = vsel %vm520, %v506, 0
        %v597 = vsel %vm520, %v507, 0
        %v600 = vsel %vm520, %v508, 0
        %v603 = vsel %vm520, %v509, 0
        %v606 = vsel %vm520, %v510, 0
        %v609 = vsel %vm520, %v511, 0
        %v612 = vsel %vm520, %v512, 0
        %v615 = vsel %vm520, %v513, 0
        %617 = vmatprep.subr.bf16.mxu0 0
        %618 = vmatpush1.bf16.msra.mxu0 %v518
        %619 = vmatprep.subr.bf16.mxu0 0
        %620 = vmatpush1.bf16.msra.mxu0 0
        %621 = vmatprep.subr.bf16.mxu0 0
        %622 = vmatpush1.bf16.msra.mxu0 0
        %623 = vmatprep.subr.bf16.mxu0 0
        %624 = vmatpush1.bf16.msra.mxu0 0
        %625 = vmatprep.subr.bf16.mxu0 0
        %626 = vmatpush1.bf16.msra.mxu0 0
        %627 = vmatprep.subr.bf16.mxu0 0
        %628 = vmatpush1.bf16.msra.mxu0 0
        %629 = vmatprep.subr.bf16.mxu0 0
        %630 = vmatpush1.bf16.msra.mxu0 0
        %631 = vmatprep.subr.bf16.mxu0 0
        %632 = vmatpush1.bf16.msra.mxu0 0
        %633 = vmatprep.subr.bf16.mxu0 0
        %634 = vmatpush1.bf16.msra.mxu0 0
        %635 = vmatprep.subr.bf16.mxu0 0
        %636 = vmatpush1.bf16.msra.mxu0 0
        %637 = vmatprep.subr.bf16.mxu0 0
        %638 = vmatpush1.bf16.msra.mxu0 0
        %639 = vmatprep.subr.bf16.mxu0 0
        %640 = vmatpush1.bf16.msra.mxu0 0
        %641 = vmatprep.subr.bf16.mxu0 0
        %642 = vmatpush1.bf16.msra.mxu0 0
        %643 = vmatprep.subr.bf16.mxu0 0
        %644 = vmatpush1.bf16.msra.mxu0 0
        %645 = vmatprep.subr.bf16.mxu0 0
        %646 = vmatpush1.bf16.msra.mxu0 0
        %647 = vmatprep.subr.bf16.mxu0 0
        %648 = vmatpush1.bf16.msra.mxu0 0
        %649 = vmatprep.mubr.bf16.mxu0 0
        %650 = vmatmul.mubr.bf16.gmra.mrb[0].mxu0 %v522
        %v651 = vpop.f32.mrb[0].mxu0
        %v652 = vadd.f32 %v352, %v651
        %v653 = vpop.f32.mrb[0].mxu0
        %v654 = vpop.f32.mrb[0].mxu0
        %v655 = vadd.f32 %v352, %v654
        %v656 = vpop.f32.mrb[0].mxu0
        %657 = vmatprep.mubr.bf16.mxu0 0
        %658 = vmatmul.mubr.bf16.gmra.mrb[0].mxu0 %v525
        %v659 = vpop.f32.mrb[0].mxu0
        %v660 = vadd.f32 %v352, %v659
        %v661 = vpop.f32.mrb[0].mxu0
        %v662 = vpop.f32.mrb[0].mxu0
        %v663 = vadd.f32 %v352, %v662
        %v664 = vpop.f32.mrb[0].mxu0
        %665 = vmatprep.mubr.bf16.mxu0 0
        %666 = vmatmul.mubr.bf16.gmra.mrb[0].mxu0 %v528
        %v667 = vpop.f32.mrb[0].mxu0
        %v668 = vadd.f32 %v352, %v667
        %v669 = vpop.f32.mrb[0].mxu0
        %v670 = vpop.f32.mrb[0].mxu0
        %v671 = vadd.f32 %v352, %v670
        %v672 = vpop.f32.mrb[0].mxu0
        %673 = vmatprep.mubr.bf16.mxu0 0
        %674 = vmatmul.mubr.bf16.gmra.mrb[0].mxu0 %v531
        %v675 = vpop.f32.mrb[0].mxu0
        %v676 = vadd.f32 %v352, %v675
        %v677 = vpop.f32.mrb[0].mxu0
        %v678 = vpop.f32.mrb[0].mxu0
        %v679 = vadd.f32 %v352, %v678
        %v680 = vpop.f32.mrb[0].mxu0
        %681 = vmatprep.mubr.bf16.mxu0 0
        %682 = vmatmul.mubr.bf16.gmra.mrb[0].mxu0 %v534
        %v683 = vpop.f32.mrb[0].mxu0
        %v684 = vadd.f32 %v352, %v683
        %v685 = vpop.f32.mrb[0].mxu0
        %v686 = vpop.f32.mrb[0].mxu0
        %v687 = vadd.f32 %v352, %v686
        %v688 = vpop.f32.mrb[0].mxu0
        %689 = vmatprep.mubr.bf16.mxu0 0
        %690 = vmatmul.mubr.bf16.gmra.mrb[0].mxu0 %v537
        %v691 = vpop.f32.mrb[0].mxu0
        %v692 = vadd.f32 %v352, %v691
        %v693 = vpop.f32.mrb[0].mxu0
        %v694 = vpop.f32.mrb[0].mxu0
        %v695 = vadd.f32 %v352, %v694
        %v696 = vpop.f32.mrb[0].mxu0
        %697 = vmatprep.mubr.bf16.mxu0 0
        %698 = vmatmul.mubr.bf16.gmra.mrb[0].mxu0 %v540
        %v699 = vpop.f32.mrb[0].mxu0
        %v700 = vadd.f32 %v352, %v699
        %v701 = vpop.f32.mrb[0].mxu0
        %v702 = vpop.f32.mrb[0].mxu0
        %v703 = vadd.f32 %v352, %v702
        %v704 = vpop.f32.mrb[0].mxu0
        %705 = vmatprep.mubr.bf16.mxu0 0
        %706 = vmatmul.mubr.bf16.gmra.mrb[0].mxu0 %v543
        %v707 = vpop.f32.mrb[0].mxu0
        %v708 = vadd.f32 %v352, %v707
        %v709 = vpop.f32.mrb[0].mxu0
        %v710 = vpop.f32.mrb[0].mxu0
        %v711 = vadd.f32 %v352, %v710
        %v712 = vpop.f32.mrb[0].mxu0
        %713 = vmatprep.mubr.bf16.mxu0 0
        %714 = vmatmul.mubr.bf16.gmra.mrb[0].mxu0 %v546
        %v715 = vpop.f32.mrb[0].mxu0
        %v716 = vadd.f32 %v352, %v715
        %v717 = vpop.f32.mrb[0].mxu0
        %v718 = vpop.f32.mrb[0].mxu0
        %v719 = vadd.f32 %v352, %v718
        %v720 = vpop.f32.mrb[0].mxu0
        %721 = vmatprep.mubr.bf16.mxu0 0
        %722 = vmatmul.mubr.bf16.gmra.mrb[0].mxu0 %v549
        %v723 = vpop.f32.mrb[0].mxu0
        %v724 = vadd.f32 %v352, %v723
        %v725 = vpop.f32.mrb[0].mxu0
        %v726 = vpop.f32.mrb[0].mxu0
        %v727 = vadd.f32 %v352, %v726
        %v728 = vpop.f32.mrb[0].mxu0
        %729 = vmatprep.mubr.bf16.mxu0 0
        %730 = vmatmul.mubr.bf16.gmra.mrb[0].mxu0 %v552
        %v731 = vpop.f32.mrb[0].mxu0
        %v732 = vadd.f32 %v352, %v731
        %v733 = vpop.f32.mrb[0].mxu0
        %v734 = vpop.f32.mrb[0].mxu0
        %v735 = vadd.f32 %v352, %v734
        %v736 = vpop.f32.mrb[0].mxu0
        %737 = vmatprep.mubr.bf16.mxu0 0
        %738 = vmatmul.mubr.bf16.gmra.mrb[0].mxu0 %v555
        %v739 = vpop.f32.mrb[0].mxu0
        %v740 = vadd.f32 %v352, %v739
        %v741 = vpop.f32.mrb[0].mxu0
        %v742 = vpop.f32.mrb[0].mxu0
        %v743 = vadd.f32 %v352, %v742
        %v744 = vpop.f32.mrb[0].mxu0
        %745 = vmatprep.mubr.bf16.mxu0 0
        %746 = vmatmul.mubr.bf16.gmra.mrb[0].mxu0 %v558
        %v747 = vpop.f32.mrb[0].mxu0
        %v748 = vadd.f32 %v352, %v747
        %v749 = vpop.f32.mrb[0].mxu0
        %v750 = vpop.f32.mrb[0].mxu0
        %v751 = vadd.f32 %v352, %v750
        %v752 = vpop.f32.mrb[0].mxu0
        %753 = vmatprep.mubr.bf16.mxu0 0
        %754 = vmatmul.mubr.bf16.gmra.mrb[0].mxu0 %v561
        %v755 = vpop.f32.mrb[0].mxu0
        %v756 = vadd.f32 %v352, %v755
        %v757 = vpop.f32.mrb[0].mxu0
        %v758 = vpop.f32.mrb[0].mxu0
        %v759 = vadd.f32 %v352, %v758
        %v760 = vpop.f32.mrb[0].mxu0
        %761 = vmatprep.mubr.bf16.mxu0 0
        %762 = vmatmul.mubr.bf16.gmra.mrb[0].mxu0 %v564
        %v763 = vpop.f32.mrb[0].mxu0
        %v764 = vadd.f32 %v352, %v763
        %v765 = vpop.f32.mrb[0].mxu0
        %v766 = vpop.f32.mrb[0].mxu0
        %v767 = vadd.f32 %v352, %v766
        %v768 = vpop.f32.mrb[0].mxu0
        %769 = vmatprep.mubr.bf16.mxu0 0
        %770 = vmatmul.mubr.bf16.gmra.mrb[0].mxu0 %v567
        %v771 = vpop.f32.mrb[0].mxu0
        %v772 = vadd.f32 %v352, %v771
        %v773 = vpop.f32.mrb[0].mxu0
        %v774 = vpop.f32.mrb[0].mxu0
        %v775 = vadd.f32 %v352, %v774
        %v776 = vpop.f32.mrb[0].mxu0
        %777 = vmatprep.mubr.bf16.mxu0 0
        %778 = vmatmul.mubr.bf16.gmra.mrb[0].mxu0 %v570
        %v779 = vpop.f32.mrb[0].mxu0
        %v780 = vadd.f32 %v352, %v779
        %v781 = vpop.f32.mrb[0].mxu0
        %v782 = vpop.f32.mrb[0].mxu0
        %v783 = vadd.f32 %v352, %v782
        %v784 = vpop.f32.mrb[0].mxu0
        %785 = vmatprep.mubr.bf16.mxu0 0
        %786 = vmatmul.mubr.bf16.gmra.mrb[0].mxu0 %v573
        %v787 = vpop.f32.mrb[0].mxu0
        %v788 = vadd.f32 %v352, %v787
        %v789 = vpop.f32.mrb[0].mxu0
        %v790 = vpop.f32.mrb[0].mxu0
        %v791 = vadd.f32 %v352, %v790
        %v792 = vpop.f32.mrb[0].mxu0
        %793 = vmatprep.mubr.bf16.mxu0 0
        %794 = vmatmul.mubr.bf16.gmra.mrb[0].mxu0 %v576
        %v795 = vpop.f32.mrb[0].mxu0
        %v796 = vadd.f32 %v352, %v795
        %v797 = vpop.f32.mrb[0].mxu0
        %v798 = vpop.f32.mrb[0].mxu0
        %v799 = vadd.f32 %v352, %v798
        %v800 = vpop.f32.mrb[0].mxu0
        %801 = vmatprep.mubr.bf16.mxu0 0
        %802 = vmatmul.mubr.bf16.gmra.mrb[0].mxu0 %v579
        %v803 = vpop.f32.mrb[0].mxu0
        %v804 = vadd.f32 %v352, %v803
        %v805 = vpop.f32.mrb[0].mxu0
        %v806 = vpop.f32.mrb[0].mxu0
        %v807 = vadd.f32 %v352, %v806
        %v808 = vpop.f32.mrb[0].mxu0
        %809 = vmatprep.mubr.bf16.mxu0 0
        %810 = vmatmul.mubr.bf16.gmra.mrb[0].mxu0 %v582
        %v811 = vpop.f32.mrb[0].mxu0
        %v812 = vadd.f32 %v352, %v811
        %v813 = vpop.f32.mrb[0].mxu0
        %v814 = vpop.f32.mrb[0].mxu0
        %v815 = vadd.f32 %v352, %v814
        %v816 = vpop.f32.mrb[0].mxu0
        %817 = vmatprep.mubr.bf16.mxu0 0
        %818 = vmatmul.mubr.bf16.gmra.mrb[0].mxu0 %v585
        %v819 = vpop.f32.mrb[0].mxu0
        %v820 = vadd.f32 %v352, %v819
        %v821 = vpop.f32.mrb[0].mxu0
        %v822 = vpop.f32.mrb[0].mxu0
        %v823 = vadd.f32 %v352, %v822
        %v824 = vpop.f32.mrb[0].mxu0
        %825 = vmatprep.mubr.bf16.mxu0 0
        %826 = vmatmul.mubr.bf16.gmra.mrb[0].mxu0 %v588
        %v827 = vpop.f32.mrb[0].mxu0
        %v828 = vadd.f32 %v352, %v827
        %v829 = vpop.f32.mrb[0].mxu0
        %v830 = vpop.f32.mrb[0].mxu0
        %v831 = vadd.f32 %v352, %v830
        %v832 = vpop.f32.mrb[0].mxu0
        %833 = vmatprep.mubr.bf16.mxu0 0
        %834 = vmatmul.mubr.bf16.gmra.mrb[0].mxu0 %v591
        %v835 = vpop.f32.mrb[0].mxu0
        %v836 = vadd.f32 %v352, %v835
        %v837 = vpop.f32.mrb[0].mxu0
        %v838 = vpop.f32.mrb[0].mxu0
        %v839 = vadd.f32 %v352, %v838
        %v840 = vpop.f32.mrb[0].mxu0
        %841 = vmatprep.mubr.bf16.mxu0 0
        %842 = vmatmul.mubr.bf16.gmra.mrb[0].mxu0 %v594
        %v843 = vpop.f32.mrb[0].mxu0
        %v844 = vadd.f32 %v352, %v843
        %v845 = vpop.f32.mrb[0].mxu0
        %v846 = vpop.f32.mrb[0].mxu0
        %v847 = vadd.f32 %v352, %v846
        %v848 = vpop.f32.mrb[0].mxu0
        %849 = vmatprep.mubr.bf16.mxu0 0
        %850 = vmatmul.mubr.bf16.gmra.mrb[0].mxu0 %v597
        %v851 = vpop.f32.mrb[0].mxu0
        %v852 = vadd.f32 %v352, %v851
        %v853 = vpop.f32.mrb[0].mxu0
        %v854 = vpop.f32.mrb[0].mxu0
        %v855 = vadd.f32 %v352, %v854
        %v856 = vpop.f32.mrb[0].mxu0
        %857 = vmatprep.mubr.bf16.mxu0 0
        %858 = vmatmul.mubr.bf16.gmra.mrb[0].mxu0 %v600
        %v859 = vpop.f32.mrb[0].mxu0
        %v860 = vadd.f32 %v352, %v859
        %v861 = vpop.f32.mrb[0].mxu0
        %v862 = vpop.f32.mrb[0].mxu0
        %v863 = vadd.f32 %v352, %v862
        %v864 = vpop.f32.mrb[0].mxu0
        %865 = vmatprep.mubr.bf16.mxu0 0
        %866 = vmatmul.mubr.bf16.gmra.mrb[0].mxu0 %v603
        %v867 = vpop.f32.mrb[0].mxu0
        %v868 = vadd.f32 %v352, %v867
        %v869 = vpop.f32.mrb[0].mxu0
        %v870 = vpop.f32.mrb[0].mxu0
        %v871 = vadd.f32 %v352, %v870
        %v872 = vpop.f32.mrb[0].mxu0
        %873 = vmatprep.mubr.bf16.mxu0 0
        %874 = vmatmul.mubr.bf16.gmra.mrb[0].mxu0 %v606
        %v875 = vpop.f32.mrb[0].mxu0
        %v876 = vadd.f32 %v352, %v875
        %v877 = vpop.f32.mrb[0].mxu0
        %v878 = vpop.f32.mrb[0].mxu0
        %v879 = vadd.f32 %v352, %v878
        %v880 = vpop.f32.mrb[0].mxu0
        %881 = vmatprep.mubr.bf16.mxu0 0
        %882 = vmatmul.mubr.bf16.gmra.mrb[0].mxu0 %v609
        %v883 = vpop.f32.mrb[0].mxu0
        %v884 = vadd.f32 %v352, %v883
        %v885 = vpop.f32.mrb[0].mxu0
        %v886 = vpop.f32.mrb[0].mxu0
        %v887 = vadd.f32 %v352, %v886
        %v888 = vpop.f32.mrb[0].mxu0
        %889 = vmatprep.mubr.bf16.mxu0 0
        %890 = vmatmul.mubr.bf16.gmra.mrb[0].mxu0 %v612
        %v891 = vpop.f32.mrb[0].mxu0
        %v892 = vadd.f32 %v352, %v891
        %v893 = vpop.f32.mrb[0].mxu0
        %v894 = vpop.f32.mrb[0].mxu0
        %v895 = vadd.f32 %v352, %v894
        %v896 = vpop.f32.mrb[0].mxu0
        %897 = vmatprep.mubr.bf16.mxu0 0
        %898 = vmatmul.mubr.bf16.gmra.mrb[0].mxu0 %v615
        %v899 = vpop.f32.mrb[0].mxu0
        %v900 = vadd.f32 %v352, %v899
        %v901 = vpop.f32.mrb[0].mxu0
        %v902 = vpop.f32.mrb[0].mxu0
        %v903 = vadd.f32 %v352, %v902
        %v904 = vpop.f32.mrb[0].mxu0
        %905 = vdwg.mxu0
        %v906 = vmax.f32 %v652, 0.0
        %v907 = vmax.f32 %v655, 0.0
        %v908 = vmax.f32 %v660, 0.0
        %v909 = vmax.f32 %v663, 0.0
        %v910 = vmax.f32 %v668, 0.0
        %v911 = vmax.f32 %v671, 0.0
        %v912 = vmax.f32 %v676, 0.0
        %v913 = vmax.f32 %v679, 0.0
        %v914 = vmax.f32 %v684, 0.0
        %v915 = vmax.f32 %v687, 0.0
        %v916 = vmax.f32 %v692, 0.0
        %v917 = vmax.f32 %v695, 0.0
        %v918 = vmax.f32 %v700, 0.0
        %v919 = vmax.f32 %v703, 0.0
        %v920 = vmax.f32 %v708, 0.0
        %v921 = vmax.f32 %v711, 0.0
        %v922 = vmax.f32 %v716, 0.0
        %v923 = vmax.f32 %v719, 0.0
        %v924 = vmax.f32 %v724, 0.0
        %v925 = vmax.f32 %v727, 0.0
        %v926 = vmax.f32 %v732, 0.0
        %v927 = vmax.f32 %v735, 0.0
        %v928 = vmax.f32 %v740, 0.0
        %v929 = vmax.f32 %v743, 0.0
        %v930 = vmax.f32 %v748, 0.0
        %v931 = vmax.f32 %v751, 0.0
        %v932 = vmax.f32 %v756, 0.0
        %v933 = vmax.f32 %v759, 0.0
        %v934 = vmax.f32 %v764, 0.0
        %v935 = vmax.f32 %v767, 0.0
        %v936 = vmax.f32 %v772, 0.0
        %v937 = vmax.f32 %v775, 0.0
        %v938 = vmax.f32 %v780, 0.0
        %v939 = vmax.f32 %v783, 0.0
        %v940 = vmax.f32 %v788, 0.0
        %v941 = vmax.f32 %v791, 0.0
        %v942 = vmax.f32 %v796, 0.0
        %v943 = vmax.f32 %v799, 0.0
        %v944 = vmax.f32 %v804, 0.0
        %v945 = vmax.f32 %v807, 0.0
        %v946 = vmax.f32 %v812, 0.0
        %v947 = vmax.f32 %v815, 0.0
        %v948 = vmax.f32 %v820, 0.0
        %v949 = vmax.f32 %v823, 0.0
        %v950 = vmax.f32 %v828, 0.0
        %v951 = vmax.f32 %v831, 0.0
        %v952 = vmax.f32 %v836, 0.0
        %v953 = vmax.f32 %v839, 0.0
        %v954 = vmax.f32 %v844, 0.0
        %v955 = vmax.f32 %v847, 0.0
        %v956 = vmax.f32 %v852, 0.0
        %v957 = vmax.f32 %v855, 0.0
        %v958 = vmax.f32 %v860, 0.0
        %v959 = vmax.f32 %v863, 0.0
        %v960 = vmax.f32 %v868, 0.0
        %v961 = vmax.f32 %v871, 0.0
        %v962 = vmax.f32 %v876, 0.0
        %v963 = vmax.f32 %v879, 0.0
        %v964 = vmax.f32 %v884, 0.0
        %v965 = vmax.f32 %v887, 0.0
        %v966 = vmax.f32 %v892, 0.0
        %v967 = vmax.f32 %v895, 0.0
        %v968 = vmax.f32 %v900, 0.0
        %v969 = vmax.f32 %v903, 0.0
        %v970 = vpack.c.bf16 %v907, %v906
        %v971 = vpack.c.bf16 %v909, %v908
        %v972 = vpack.c.bf16 %v911, %v910
        %v973 = vpack.c.bf16 %v913, %v912
        %v974 = vpack.c.bf16 %v915, %v914
        %v975 = vpack.c.bf16 %v917, %v916
        %v976 = vpack.c.bf16 %v919, %v918
        %v977 = vpack.c.bf16 %v921, %v920
        %v978 = vpack.c.bf16 %v923, %v922
        %v979 = vpack.c.bf16 %v925, %v924
        %v980 = vpack.c.bf16 %v927, %v926
        %v981 = vpack.c.bf16 %v929, %v928
        %v982 = vpack.c.bf16 %v931, %v930
        %v983 = vpack.c.bf16 %v933, %v932
        %v984 = vpack.c.bf16 %v935, %v934
        %v985 = vpack.c.bf16 %v937, %v936
        %v986 = vpack.c.bf16 %v939, %v938
        %v987 = vpack.c.bf16 %v941, %v940
        %v988 = vpack.c.bf16 %v943, %v942
        %v989 = vpack.c.bf16 %v945, %v944
        %v990 = vpack.c.bf16 %v947, %v946
        %v991 = vpack.c.bf16 %v949, %v948
        %v992 = vpack.c.bf16 %v951, %v950
        %v993 = vpack.c.bf16 %v953, %v952
        %v994 = vpack.c.bf16 %v955, %v954
        %v995 = vpack.c.bf16 %v957, %v956
        %v996 = vpack.c.bf16 %v959, %v958
        %v997 = vpack.c.bf16 %v961, %v960
        %v998 = vpack.c.bf16 %v963, %v962
        %v999 = vpack.c.bf16 %v965, %v964
        %v1000 = vpack.c.bf16 %v967, %v966
        %v1001 = vpack.c.bf16 %v969, %v968
        %v1002 = vld [vmem:[%s3] sm:$0xf]
        %v1003 = vld [vmem:[%s3 + $0x4] sm:$0xf]
        %v1004 = vld [vmem:[%s3 + $0x8] sm:$0xf]
        %v1005 = vld [vmem:[%s3 + $0xc] sm:$0xf]
        %v1006 = vld [vmem:[%s3 + $0x10] sm:$0xf]
        %v1007 = vld [vmem:[%s3 + $0x14] sm:$0xf]
        %v1008 = vld [vmem:[%s3 + $0x18] sm:$0xf]
        %v1009 = vld [vmem:[%s3 + $0x1c] sm:$0xf]
        %v1010 = vld [vmem:[%s3 + $0x20] sm:$0xf]
        %v1011 = vld [vmem:[%s3 + $0x24] sm:$0xf]
        %v1012 = vld [vmem:[%s3 + $0x28] sm:$0xf]
        %v1013 = vld [vmem:[%s3 + $0x2c] sm:$0xf]
        %v1014 = vld [vmem:[%s3 + $0x30] sm:$0xf]
        %v1015 = vld [vmem:[%s3 + $0x34] sm:$0xf]
        %v1016 = vld [vmem:[%s3 + $0x38] sm:$0xf]
        %v1017 = vld [vmem:[%s3 + $0x3c] sm:$0xf]
        %v1018 = vld [vmem:[%s4] sm:$0x1]
        %v1020 = vlaneseq
        %v1021 = vshrl.u32 %v1020, 7
        %v1022 = vsub.s32 0, %v1021
        %v1023 = vrot.slane %v1018, %v1022
        %v1041 = vunpack.c.l.b16 %v1002
        %v1042 = vunpack.c.l.b16 %v1003
        %v1043 = vunpack.c.l.b16 %v1004
        %v1044 = vunpack.c.l.b16 %v1005
        %v1045 = vunpack.c.l.b16 %v1006
        %v1046 = vunpack.c.l.b16 %v1007
        %v1047 = vunpack.c.l.b16 %v1008
        %v1048 = vunpack.c.l.b16 %v1009
        %v1049 = vunpack.c.l.b16 %v1010
        %v1050 = vunpack.c.l.b16 %v1011
        %v1051 = vunpack.c.l.b16 %v1012
        %v1052 = vunpack.c.l.b16 %v1013
        %v1053 = vunpack.c.l.b16 %v1014
        %v1054 = vunpack.c.l.b16 %v1015
        %v1055 = vunpack.c.l.b16 %v1016
        %v1056 = vunpack.c.l.b16 %v1017
        %v1057 = vpack.c.b16 %v1042, %v1041
        %v1058 = vpack.c.b16 %v1044, %v1043
        %v1059 = vpack.c.b16 %v1046, %v1045
        %v1060 = vpack.c.b16 %v1048, %v1047
        %v1061 = vpack.c.b16 %v1050, %v1049
        %v1062 = vpack.c.b16 %v1052, %v1051
        %v1063 = vpack.c.b16 %v1054, %v1053
        %v1064 = vpack.c.b16 %v1056, %v1055
        %1073 = vmatprep.subr.bf16.mxu0 0
        %1074 = vmatpush1.bf16.msra.mxu0 %v1057
        %1075 = vmatprep.subr.bf16.mxu0 0
        %1076 = vmatpush1.bf16.msra.mxu0 %v1058
        %1077 = vmatprep.subr.bf16.mxu0 0
        %1078 = vmatpush1.bf16.msra.mxu0 %v1059
        %1079 = vmatprep.subr.bf16.mxu0 0
        %1080 = vmatpush1.bf16.msra.mxu0 %v1060
        %1081 = vmatprep.subr.bf16.mxu0 0
        %1082 = vmatpush1.bf16.msra.mxu0 %v1061
        %1083 = vmatprep.subr.bf16.mxu0 0
        %1084 = vmatpush1.bf16.msra.mxu0 %v1062
        %1085 = vmatprep.subr.bf16.mxu0 0
        %1086 = vmatpush1.bf16.msra.mxu0 %v1063
        %1087 = vmatprep.subr.bf16.mxu0 0
        %1088 = vmatpush1.bf16.msra.mxu0 %v1064
        %1089 = vmatprep.subr.bf16.mxu0 0
        %1090 = vmatpush1.bf16.msra.mxu0 0
        %1091 = vmatprep.subr.bf16.mxu0 0
        %1092 = vmatpush1.bf16.msra.mxu0 0
        %1093 = vmatprep.subr.bf16.mxu0 0
        %1094 = vmatpush1.bf16.msra.mxu0 0
        %1095 = vmatprep.subr.bf16.mxu0 0
        %1096 = vmatpush1.bf16.msra.mxu0 0
        %1097 = vmatprep.subr.bf16.mxu0 0
        %1098 = vmatpush1.bf16.msra.mxu0 0
        %1099 = vmatprep.subr.bf16.mxu0 0
        %1100 = vmatpush1.bf16.msra.mxu0 0
        %1101 = vmatprep.subr.bf16.mxu0 0
        %1102 = vmatpush1.bf16.msra.mxu0 0
        %1103 = vmatprep.subr.bf16.mxu0 0
        %1104 = vmatpush1.bf16.msra.mxu0 0
        %1105 = vmatprep.mubr.bf16.mxu0 0
        %1106 = vmatmul.mubr.bf16.gmra.mrb[0].mxu0 %v970
        %v1107 = vpop.f32.mrb[0].mxu0
        %v1108 = vadd.f32 %v1023, %v1107
        %v1109 = vpop.f32.mrb[0].mxu0
        %v1110 = vpop.f32.mrb[0].mxu0
        %v1111 = vadd.f32 %v1023, %v1110
        %v1112 = vpop.f32.mrb[0].mxu0
        %1113 = vmatprep.mubr.bf16.mxu0 0
        %1114 = vmatmul.mubr.bf16.gmra.mrb[0].mxu0 %v971
        %v1115 = vpop.f32.mrb[0].mxu0
        %v1116 = vadd.f32 %v1023, %v1115
        %v1117 = vpop.f32.mrb[0].mxu0
        %v1118 = vpop.f32.mrb[0].mxu0
        %v1119 = vadd.f32 %v1023, %v1118
        %v1120 = vpop.f32.mrb[0].mxu0
        %1121 = vmatprep.mubr.bf16.mxu0 0
        %1122 = vmatmul.mubr.bf16.gmra.mrb[0].mxu0 %v972
        %v1123 = vpop.f32.mrb[0].mxu0
        %v1124 = vadd.f32 %v1023, %v1123
        %v1125 = vpop.f32.mrb[0].mxu0
        %v1126 = vpop.f32.mrb[0].mxu0
        %v1127 = vadd.f32 %v1023, %v1126
        %v1128 = vpop.f32.mrb[0].mxu0
        %1129 = vmatprep.mubr.bf16.mxu0 0
        %1130 = vmatmul.mubr.bf16.gmra.mrb[0].mxu0 %v973
        %v1131 = vpop.f32.mrb[0].mxu0
        %v1132 = vadd.f32 %v1023, %v1131
        %v1133 = vpop.f32.mrb[0].mxu0
        %v1134 = vpop.f32.mrb[0].mxu0
        %v1135 = vadd.f32 %v1023, %v1134
        %v1136 = vpop.f32.mrb[0].mxu0
        %1137 = vmatprep.mubr.bf16.mxu0 0
        %1138 = vmatmul.mubr.bf16.gmra.mrb[0].mxu0 %v974
        %v1139 = vpop.f32.mrb[0].mxu0
        %v1140 = vadd.f32 %v1023, %v1139
        %v1141 = vpop.f32.mrb[0].mxu0
        %v1142 = vpop.f32.mrb[0].mxu0
        %v1143 = vadd.f32 %v1023, %v1142
        %v1144 = vpop.f32.mrb[0].mxu0
        %1145 = vmatprep.mubr.bf16.mxu0 0
        %1146 = vmatmul.mubr.bf16.gmra.mrb[0].mxu0 %v975
        %v1147 = vpop.f32.mrb[0].mxu0
        %v1148 = vadd.f32 %v1023, %v1147
        %v1149 = vpop.f32.mrb[0].mxu0
        %v1150 = vpop.f32.mrb[0].mxu0
        %v1151 = vadd.f32 %v1023, %v1150
        %v1152 = vpop.f32.mrb[0].mxu0
        %1153 = vmatprep.mubr.bf16.mxu0 0
        %1154 = vmatmul.mubr.bf16.gmra.mrb[0].mxu0 %v976
        %v1155 = vpop.f32.mrb[0].mxu0
        %v1156 = vadd.f32 %v1023, %v1155
        %v1157 = vpop.f32.mrb[0].mxu0
        %v1158 = vpop.f32.mrb[0].mxu0
        %v1159 = vadd.f32 %v1023, %v1158
        %v1160 = vpop.f32.mrb[0].mxu0
        %1161 = vmatprep.mubr.bf16.mxu0 0
        %1162 = vmatmul.mubr.bf16.gmra.mrb[0].mxu0 %v977
        %v1163 = vpop.f32.mrb[0].mxu0
        %v1164 = vadd.f32 %v1023, %v1163
        %v1165 = vpop.f32.mrb[0].mxu0
        %v1166 = vpop.f32.mrb[0].mxu0
        %v1167 = vadd.f32 %v1023, %v1166
        %v1168 = vpop.f32.mrb[0].mxu0
        %1169 = vmatprep.mubr.bf16.mxu0 0
        %1170 = vmatmul.mubr.bf16.gmra.mrb[0].mxu0 %v978
        %v1171 = vpop.f32.mrb[0].mxu0
        %v1172 = vadd.f32 %v1023, %v1171
        %v1173 = vpop.f32.mrb[0].mxu0
        %v1174 = vpop.f32.mrb[0].mxu0
        %v1175 = vadd.f32 %v1023, %v1174
        %v1176 = vpop.f32.mrb[0].mxu0
        %1177 = vmatprep.mubr.bf16.mxu0 0
        %1178 = vmatmul.mubr.bf16.gmra.mrb[0].mxu0 %v979
        %v1179 = vpop.f32.mrb[0].mxu0
        %v1180 = vadd.f32 %v1023, %v1179
        %v1181 = vpop.f32.mrb[0].mxu0
        %v1182 = vpop.f32.mrb[0].mxu0
        %v1183 = vadd.f32 %v1023, %v1182
        %v1184 = vpop.f32.mrb[0].mxu0
        %1185 = vmatprep.mubr.bf16.mxu0 0
        %1186 = vmatmul.mubr.bf16.gmra.mrb[0].mxu0 %v980
        %v1187 = vpop.f32.mrb[0].mxu0
        %v1188 = vadd.f32 %v1023, %v1187
        %v1189 = vpop.f32.mrb[0].mxu0
        %v1190 = vpop.f32.mrb[0].mxu0
        %v1191 = vadd.f32 %v1023, %v1190
        %v1192 = vpop.f32.mrb[0].mxu0
        %1193 = vmatprep.mubr.bf16.mxu0 0
        %1194 = vmatmul.mubr.bf16.gmra.mrb[0].mxu0 %v981
        %v1195 = vpop.f32.mrb[0].mxu0
        %v1196 = vadd.f32 %v1023, %v1195
        %v1197 = vpop.f32.mrb[0].mxu0
        %v1198 = vpop.f32.mrb[0].mxu0
        %v1199 = vadd.f32 %v1023, %v1198
        %v1200 = vpop.f32.mrb[0].mxu0
        %1201 = vmatprep.mubr.bf16.mxu0 0
        %1202 = vmatmul.mubr.bf16.gmra.mrb[0].mxu0 %v982
        %v1203 = vpop.f32.mrb[0].mxu0
        %v1204 = vadd.f32 %v1023, %v1203
        %v1205 = vpop.f32.mrb[0].mxu0
        %v1206 = vpop.f32.mrb[0].mxu0
        %v1207 = vadd.f32 %v1023, %v1206
        %v1208 = vpop.f32.mrb[0].mxu0
        %1209 = vmatprep.mubr.bf16.mxu0 0
        %1210 = vmatmul.mubr.bf16.gmra.mrb[0].mxu0 %v983
        %v1211 = vpop.f32.mrb[0].mxu0
        %v1212 = vadd.f32 %v1023, %v1211
        %v1213 = vpop.f32.mrb[0].mxu0
        %v1214 = vpop.f32.mrb[0].mxu0
        %v1215 = vadd.f32 %v1023, %v1214
        %v1216 = vpop.f32.mrb[0].mxu0
        %1217 = vmatprep.mubr.bf16.mxu0 0
        %1218 = vmatmul.mubr.bf16.gmra.mrb[0].mxu0 %v984
        %v1219 = vpop.f32.mrb[0].mxu0
        %v1220 = vadd.f32 %v1023, %v1219
        %v1221 = vpop.f32.mrb[0].mxu0
        %v1222 = vpop.f32.mrb[0].mxu0
        %v1223 = vadd.f32 %v1023, %v1222
        %v1224 = vpop.f32.mrb[0].mxu0
        %1225 = vmatprep.mubr.bf16.mxu0 0
        %1226 = vmatmul.mubr.bf16.gmra.mrb[0].mxu0 %v985
        %v1227 = vpop.f32.mrb[0].mxu0
        %v1228 = vadd.f32 %v1023, %v1227
        %v1229 = vpop.f32.mrb[0].mxu0
        %v1230 = vpop.f32.mrb[0].mxu0
        %v1231 = vadd.f32 %v1023, %v1230
        %v1232 = vpop.f32.mrb[0].mxu0
        %1233 = vmatprep.mubr.bf16.mxu0 0
        %1234 = vmatmul.mubr.bf16.gmra.mrb[0].mxu0 %v986
        %v1235 = vpop.f32.mrb[0].mxu0
        %v1236 = vadd.f32 %v1023, %v1235
        %v1237 = vpop.f32.mrb[0].mxu0
        %v1238 = vpop.f32.mrb[0].mxu0
        %v1239 = vadd.f32 %v1023, %v1238
        %v1240 = vpop.f32.mrb[0].mxu0
        %1241 = vmatprep.mubr.bf16.mxu0 0
        %1242 = vmatmul.mubr.bf16.gmra.mrb[0].mxu0 %v987
        %v1243 = vpop.f32.mrb[0].mxu0
        %v1244 = vadd.f32 %v1023, %v1243
        %v1245 = vpop.f32.mrb[0].mxu0
        %v1246 = vpop.f32.mrb[0].mxu0
        %v1247 = vadd.f32 %v1023, %v1246
        %v1248 = vpop.f32.mrb[0].mxu0
        %1249 = vmatprep.mubr.bf16.mxu0 0
        %1250 = vmatmul.mubr.bf16.gmra.mrb[0].mxu0 %v988
        %v1251 = vpop.f32.mrb[0].mxu0
        %v1252 = vadd.f32 %v1023, %v1251
        %v1253 = vpop.f32.mrb[0].mxu0
        %v1254 = vpop.f32.mrb[0].mxu0
        %v1255 = vadd.f32 %v1023, %v1254
        %v1256 = vpop.f32.mrb[0].mxu0
        %1257 = vmatprep.mubr.bf16.mxu0 0
        %1258 = vmatmul.mubr.bf16.gmra.mrb[0].mxu0 %v989
        %v1259 = vpop.f32.mrb[0].mxu0
        %v1260 = vadd.f32 %v1023, %v1259
        %v1261 = vpop.f32.mrb[0].mxu0
        %v1262 = vpop.f32.mrb[0].mxu0
        %v1263 = vadd.f32 %v1023, %v1262
        %v1264 = vpop.f32.mrb[0].mxu0
        %1265 = vmatprep.mubr.bf16.mxu0 0
        %1266 = vmatmul.mubr.bf16.gmra.mrb[0].mxu0 %v990
        %v1267 = vpop.f32.mrb[0].mxu0
        %v1268 = vadd.f32 %v1023, %v1267
        %v1269 = vpop.f32.mrb[0].mxu0
        %v1270 = vpop.f32.mrb[0].mxu0
        %v1271 = vadd.f32 %v1023, %v1270
        %v1272 = vpop.f32.mrb[0].mxu0
        %1273 = vmatprep.mubr.bf16.mxu0 0
        %1274 = vmatmul.mubr.bf16.gmra.mrb[0].mxu0 %v991
        %v1275 = vpop.f32.mrb[0].mxu0
        %v1276 = vadd.f32 %v1023, %v1275
        %v1277 = vpop.f32.mrb[0].mxu0
        %v1278 = vpop.f32.mrb[0].mxu0
        %v1279 = vadd.f32 %v1023, %v1278
        %v1280 = vpop.f32.mrb[0].mxu0
        %1281 = vmatprep.mubr.bf16.mxu0 0
        %1282 = vmatmul.mubr.bf16.gmra.mrb[0].mxu0 %v992
        %v1283 = vpop.f32.mrb[0].mxu0
        %v1284 = vadd.f32 %v1023, %v1283
        %v1285 = vpop.f32.mrb[0].mxu0
        %v1286 = vpop.f32.mrb[0].mxu0
        %v1287 = vadd.f32 %v1023, %v1286
        %v1288 = vpop.f32.mrb[0].mxu0
        %1289 = vmatprep.mubr.bf16.mxu0 0
        %1290 = vmatmul.mubr.bf16.gmra.mrb[0].mxu0 %v993
        %v1291 = vpop.f32.mrb[0].mxu0
        %v1292 = vadd.f32 %v1023, %v1291
        %v1293 = vpop.f32.mrb[0].mxu0
        %v1294 = vpop.f32.mrb[0].mxu0
        %v1295 = vadd.f32 %v1023, %v1294
        %v1296 = vpop.f32.mrb[0].mxu0
        %1297 = vmatprep.mubr.bf16.mxu0 0
        %1298 = vmatmul.mubr.bf16.gmra.mrb[0].mxu0 %v994
        %v1299 = vpop.f32.mrb[0].mxu0
        %v1300 = vadd.f32 %v1023, %v1299
        %v1301 = vpop.f32.mrb[0].mxu0
        %v1302 = vpop.f32.mrb[0].mxu0
        %v1303 = vadd.f32 %v1023, %v1302
        %v1304 = vpop.f32.mrb[0].mxu0
        %1305 = vmatprep.mubr.bf16.mxu0 0
        %1306 = vmatmul.mubr.bf16.gmra.mrb[0].mxu0 %v995
        %v1307 = vpop.f32.mrb[0].mxu0
        %v1308 = vadd.f32 %v1023, %v1307
        %v1309 = vpop.f32.mrb[0].mxu0
        %v1310 = vpop.f32.mrb[0].mxu0
        %v1311 = vadd.f32 %v1023, %v1310
        %v1312 = vpop.f32.mrb[0].mxu0
        %1313 = vmatprep.mubr.bf16.mxu0 0
        %1314 = vmatmul.mubr.bf16.gmra.mrb[0].mxu0 %v996
        %v1315 = vpop.f32.mrb[0].mxu0
        %v1316 = vadd.f32 %v1023, %v1315
        %v1317 = vpop.f32.mrb[0].mxu0
        %v1318 = vpop.f32.mrb[0].mxu0
        %v1319 = vadd.f32 %v1023, %v1318
        %v1320 = vpop.f32.mrb[0].mxu0
        %1321 = vmatprep.mubr.bf16.mxu0 0
        %1322 = vmatmul.mubr.bf16.gmra.mrb[0].mxu0 %v997
        %v1323 = vpop.f32.mrb[0].mxu0
        %v1324 = vadd.f32 %v1023, %v1323
        %v1325 = vpop.f32.mrb[0].mxu0
        %v1326 = vpop.f32.mrb[0].mxu0
        %v1327 = vadd.f32 %v1023, %v1326
        %v1328 = vpop.f32.mrb[0].mxu0
        %1329 = vmatprep.mubr.bf16.mxu0 0
        %1330 = vmatmul.mubr.bf16.gmra.mrb[0].mxu0 %v998
        %v1331 = vpop.f32.mrb[0].mxu0
        %v1332 = vadd.f32 %v1023, %v1331
        %v1333 = vpop.f32.mrb[0].mxu0
        %v1334 = vpop.f32.mrb[0].mxu0
        %v1335 = vadd.f32 %v1023, %v1334
        %v1336 = vpop.f32.mrb[0].mxu0
        %1337 = vmatprep.mubr.bf16.mxu0 0
        %1338 = vmatmul.mubr.bf16.gmra.mrb[0].mxu0 %v999
        %v1339 = vpop.f32.mrb[0].mxu0
        %v1340 = vadd.f32 %v1023, %v1339
        %v1341 = vpop.f32.mrb[0].mxu0
        %v1342 = vpop.f32.mrb[0].mxu0
        %v1343 = vadd.f32 %v1023, %v1342
        %v1344 = vpop.f32.mrb[0].mxu0
        %1345 = vmatprep.mubr.bf16.mxu0 0
        %1346 = vmatmul.mubr.bf16.gmra.mrb[0].mxu0 %v1000
        %v1347 = vpop.f32.mrb[0].mxu0
        %v1348 = vadd.f32 %v1023, %v1347
        %v1349 = vpop.f32.mrb[0].mxu0
        %v1350 = vpop.f32.mrb[0].mxu0
        %v1351 = vadd.f32 %v1023, %v1350
        %v1352 = vpop.f32.mrb[0].mxu0
        %1353 = vmatprep.mubr.bf16.mxu0 0
        %1354 = vmatmul.mubr.bf16.gmra.mrb[0].mxu0 %v1001
        %v1355 = vpop.f32.mrb[0].mxu0
        %v1356 = vadd.f32 %v1023, %v1355
        %v1357 = vpop.f32.mrb[0].mxu0
        %v1358 = vpop.f32.mrb[0].mxu0
        %v1359 = vadd.f32 %v1023, %v1358
        %v1360 = vpop.f32.mrb[0].mxu0
        %1361 = vdwg.mxu0
        %v1362 = vmax.f32 %v1108, 0.0
        %v1363 = vmax.f32 %v1111, 0.0
        %v1364 = vmax.f32 %v1116, 0.0
        %v1365 = vmax.f32 %v1119, 0.0
        %v1366 = vmax.f32 %v1124, 0.0
        %v1367 = vmax.f32 %v1127, 0.0
        %v1368 = vmax.f32 %v1132, 0.0
        %v1369 = vmax.f32 %v1135, 0.0
        %v1370 = vmax.f32 %v1140, 0.0
        %v1371 = vmax.f32 %v1143, 0.0
        %v1372 = vmax.f32 %v1148, 0.0
        %v1373 = vmax.f32 %v1151, 0.0
        %v1374 = vmax.f32 %v1156, 0.0
        %v1375 = vmax.f32 %v1159, 0.0
        %v1376 = vmax.f32 %v1164, 0.0
        %v1377 = vmax.f32 %v1167, 0.0
        %v1378 = vmax.f32 %v1172, 0.0
        %v1379 = vmax.f32 %v1175, 0.0
        %v1380 = vmax.f32 %v1180, 0.0
        %v1381 = vmax.f32 %v1183, 0.0
        %v1382 = vmax.f32 %v1188, 0.0
        %v1383 = vmax.f32 %v1191, 0.0
        %v1384 = vmax.f32 %v1196, 0.0
        %v1385 = vmax.f32 %v1199, 0.0
        %v1386 = vmax.f32 %v1204, 0.0
        %v1387 = vmax.f32 %v1207, 0.0
        %v1388 = vmax.f32 %v1212, 0.0
        %v1389 = vmax.f32 %v1215, 0.0
        %v1390 = vmax.f32 %v1220, 0.0
        %v1391 = vmax.f32 %v1223, 0.0
        %v1392 = vmax.f32 %v1228, 0.0
        %v1393 = vmax.f32 %v1231, 0.0
        %v1394 = vmax.f32 %v1236, 0.0
        %v1395 = vmax.f32 %v1239, 0.0
        %v1396 = vmax.f32 %v1244, 0.0
        %v1397 = vmax.f32 %v1247, 0.0
        %v1398 = vmax.f32 %v1252, 0.0
        %v1399 = vmax.f32 %v1255, 0.0
        %v1400 = vmax.f32 %v1260, 0.0
        %v1401 = vmax.f32 %v1263, 0.0
        %v1402 = vmax.f32 %v1268, 0.0
        %v1403 = vmax.f32 %v1271, 0.0
        %v1404 = vmax.f32 %v1276, 0.0
        %v1405 = vmax.f32 %v1279, 0.0
        %v1406 = vmax.f32 %v1284, 0.0
        %v1407 = vmax.f32 %v1287, 0.0
        %v1408 = vmax.f32 %v1292, 0.0
        %v1409 = vmax.f32 %v1295, 0.0
        %v1410 = vmax.f32 %v1300, 0.0
        %v1411 = vmax.f32 %v1303, 0.0
        %v1412 = vmax.f32 %v1308, 0.0
        %v1413 = vmax.f32 %v1311, 0.0
        %v1414 = vmax.f32 %v1316, 0.0
        %v1415 = vmax.f32 %v1319, 0.0
        %v1416 = vmax.f32 %v1324, 0.0
        %v1417 = vmax.f32 %v1327, 0.0
        %v1418 = vmax.f32 %v1332, 0.0
        %v1419 = vmax.f32 %v1335, 0.0
        %v1420 = vmax.f32 %v1340, 0.0
        %v1421 = vmax.f32 %v1343, 0.0
        %v1422 = vmax.f32 %v1348, 0.0
        %v1423 = vmax.f32 %v1351, 0.0
        %v1424 = vmax.f32 %v1356, 0.0
        %v1425 = vmax.f32 %v1359, 0.0
        %v1426 = vpack.c.bf16 %v1363, %v1362
        %v1427 = vpack.c.bf16 %v1365, %v1364
        %v1428 = vpack.c.bf16 %v1367, %v1366
        %v1429 = vpack.c.bf16 %v1369, %v1368
        %v1430 = vpack.c.bf16 %v1371, %v1370
        %v1431 = vpack.c.bf16 %v1373, %v1372
        %v1432 = vpack.c.bf16 %v1375, %v1374
        %v1433 = vpack.c.bf16 %v1377, %v1376
        %v1434 = vpack.c.bf16 %v1379, %v1378
        %v1435 = vpack.c.bf16 %v1381, %v1380
        %v1436 = vpack.c.bf16 %v1383, %v1382
        %v1437 = vpack.c.bf16 %v1385, %v1384
        %v1438 = vpack.c.bf16 %v1387, %v1386
        %v1439 = vpack.c.bf16 %v1389, %v1388
        %v1440 = vpack.c.bf16 %v1391, %v1390
        %v1441 = vpack.c.bf16 %v1393, %v1392
        %v1442 = vpack.c.bf16 %v1395, %v1394
        %v1443 = vpack.c.bf16 %v1397, %v1396
        %v1444 = vpack.c.bf16 %v1399, %v1398
        %v1445 = vpack.c.bf16 %v1401, %v1400
        %v1446 = vpack.c.bf16 %v1403, %v1402
        %v1447 = vpack.c.bf16 %v1405, %v1404
        %v1448 = vpack.c.bf16 %v1407, %v1406
        %v1449 = vpack.c.bf16 %v1409, %v1408
        %v1450 = vpack.c.bf16 %v1411, %v1410
        %v1451 = vpack.c.bf16 %v1413, %v1412
        %v1452 = vpack.c.bf16 %v1415, %v1414
        %v1453 = vpack.c.bf16 %v1417, %v1416
        %v1454 = vpack.c.bf16 %v1419, %v1418
        %v1455 = vpack.c.bf16 %v1421, %v1420
        %v1456 = vpack.c.bf16 %v1423, %v1422
        %v1457 = vpack.c.bf16 %v1425, %v1424
        %v1458 = vld [vmem:[%s5] sm:$0xf]
        %v1459 = vld [vmem:[%s5 + $0x4] sm:$0xf]
        %v1460 = vld [vmem:[%s5 + $0x8] sm:$0xf]
        %v1461 = vld [vmem:[%s5 + $0xc] sm:$0xf]
        %v1462 = vld [vmem:[%s5 + $0x10] sm:$0xf]
        %v1463 = vld [vmem:[%s5 + $0x14] sm:$0xf]
        %v1464 = vld [vmem:[%s5 + $0x18] sm:$0xf]
        %v1465 = vld [vmem:[%s5 + $0x1c] sm:$0xf]
        %v1466 = vld [vmem:[%s5 + $0x20] sm:$0xf]
        %v1467 = vld [vmem:[%s5 + $0x24] sm:$0xf]
        %v1468 = vld [vmem:[%s5 + $0x28] sm:$0xf]
        %v1469 = vld [vmem:[%s5 + $0x2c] sm:$0xf]
        %v1470 = vld [vmem:[%s5 + $0x30] sm:$0xf]
        %v1471 = vld [vmem:[%s5 + $0x34] sm:$0xf]
        %v1472 = vld [vmem:[%s5 + $0x38] sm:$0xf]
        %v1473 = vld [vmem:[%s5 + $0x3c] sm:$0xf]
        %v1474 = vld [vmem:[%s6] sm:$0x1]
        %v1476 = vlaneseq
        %v1477 = vshrl.u32 %v1476, 7
        %v1478 = vsub.s32 0, %v1477
        %v1479 = vrot.slane %v1474, %v1478
        %v1497 = vunpack.c.l.b16 %v1458
        %v1498 = vunpack.c.l.b16 %v1459
        %v1499 = vunpack.c.l.b16 %v1460
        %v1500 = vunpack.c.l.b16 %v1461
        %v1501 = vunpack.c.l.b16 %v1462
        %v1502 = vunpack.c.l.b16 %v1463
        %v1503 = vunpack.c.l.b16 %v1464
        %v1504 = vunpack.c.l.b16 %v1465
        %v1505 = vunpack.c.l.b16 %v1466
        %v1506 = vunpack.c.l.b16 %v1467
        %v1507 = vunpack.c.l.b16 %v1468
        %v1508 = vunpack.c.l.b16 %v1469
        %v1509 = vunpack.c.l.b16 %v1470
        %v1510 = vunpack.c.l.b16 %v1471
        %v1511 = vunpack.c.l.b16 %v1472
        %v1512 = vunpack.c.l.b16 %v1473
        %v1513 = vpack.c.b16 %v1498, %v1497
        %v1514 = vpack.c.b16 %v1500, %v1499
        %v1515 = vpack.c.b16 %v1502, %v1501
        %v1516 = vpack.c.b16 %v1504, %v1503
        %v1517 = vpack.c.b16 %v1506, %v1505
        %v1518 = vpack.c.b16 %v1508, %v1507
        %v1519 = vpack.c.b16 %v1510, %v1509
        %v1520 = vpack.c.b16 %v1512, %v1511
        %1529 = vmatprep.subr.bf16.mxu0 0
        %1530 = vmatpush1.bf16.msra.mxu0 %v1513
        %1531 = vmatprep.subr.bf16.mxu0 0
        %1532 = vmatpush1.bf16.msra.mxu0 %v1514
        %1533 = vmatprep.subr.bf16.mxu0 0
        %1534 = vmatpush1.bf16.msra.mxu0 %v1515
        %1535 = vmatprep.subr.bf16.mxu0 0
        %1536 = vmatpush1.bf16.msra.mxu0 %v1516
        %1537 = vmatprep.subr.bf16.mxu0 0
        %1538 = vmatpush1.bf16.msra.mxu0 %v1517
        %1539 = vmatprep.subr.bf16.mxu0 0
        %1540 = vmatpush1.bf16.msra.mxu0 %v1518
        %1541 = vmatprep.subr.bf16.mxu0 0
        %1542 = vmatpush1.bf16.msra.mxu0 %v1519
        %1543 = vmatprep.subr.bf16.mxu0 0
        %1544 = vmatpush1.bf16.msra.mxu0 %v1520
        %1545 = vmatprep.subr.bf16.mxu0 0
        %1546 = vmatpush1.bf16.msra.mxu0 0
        %1547 = vmatprep.subr.bf16.mxu0 0
        %1548 = vmatpush1.bf16.msra.mxu0 0
        %1549 = vmatprep.subr.bf16.mxu0 0
        %1550 = vmatpush1.bf16.msra.mxu0 0
        %1551 = vmatprep.subr.bf16.mxu0 0
        %1552 = vmatpush1.bf16.msra.mxu0 0
        %1553 = vmatprep.subr.bf16.mxu0 0
        %1554 = vmatpush1.bf16.msra.mxu0 0
        %1555 = vmatprep.subr.bf16.mxu0 0
        %1556 = vmatpush1.bf16.msra.mxu0 0
        %1557 = vmatprep.subr.bf16.mxu0 0
        %1558 = vmatpush1.bf16.msra.mxu0 0
        %1559 = vmatprep.subr.bf16.mxu0 0
        %1560 = vmatpush1.bf16.msra.mxu0 0
        %1561 = vmatprep.mubr.bf16.mxu0 0
        %1562 = vmatmul.mubr.bf16.gmra.mrb[0].mxu0 %v1426
        %v1563 = vpop.f32.mrb[0].mxu0
        %v1564 = vadd.f32 %v1479, %v1563
        %v1565 = vpop.f32.mrb[0].mxu0
        %v1566 = vpop.f32.mrb[0].mxu0
        %v1567 = vadd.f32 %v1479, %v1566
        %v1568 = vpop.f32.mrb[0].mxu0
        %1569 = vmatprep.mubr.bf16.mxu0 0
        %1570 = vmatmul.mubr.bf16.gmra.mrb[0].mxu0 %v1427
        %v1571 = vpop.f32.mrb[0].mxu0
        %v1572 = vadd.f32 %v1479, %v1571
        %v1573 = vpop.f32.mrb[0].mxu0
        %v1574 = vpop.f32.mrb[0].mxu0
        %v1575 = vadd.f32 %v1479, %v1574
        %v1576 = vpop.f32.mrb[0].mxu0
        %1577 = vmatprep.mubr.bf16.mxu0 0
        %1578 = vmatmul.mubr.bf16.gmra.mrb[0].mxu0 %v1428
        %v1579 = vpop.f32.mrb[0].mxu0
        %v1580 = vadd.f32 %v1479, %v1579
        %v1581 = vpop.f32.mrb[0].mxu0
        %v1582 = vpop.f32.mrb[0].mxu0
        %v1583 = vadd.f32 %v1479, %v1582
        %v1584 = vpop.f32.mrb[0].mxu0
        %1585 = vmatprep.mubr.bf16.mxu0 0
        %1586 = vmatmul.mubr.bf16.gmra.mrb[0].mxu0 %v1429
        %v1587 = vpop.f32.mrb[0].mxu0
        %v1588 = vadd.f32 %v1479, %v1587
        %v1589 = vpop.f32.mrb[0].mxu0
        %v1590 = vpop.f32.mrb[0].mxu0
        %v1591 = vadd.f32 %v1479, %v1590
        %v1592 = vpop.f32.mrb[0].mxu0
        %1593 = vmatprep.mubr.bf16.mxu0 0
        %1594 = vmatmul.mubr.bf16.gmra.mrb[0].mxu0 %v1430
        %v1595 = vpop.f32.mrb[0].mxu0
        %v1596 = vadd.f32 %v1479, %v1595
        %v1597 = vpop.f32.mrb[0].mxu0
        %v1598 = vpop.f32.mrb[0].mxu0
        %v1599 = vadd.f32 %v1479, %v1598
        %v1600 = vpop.f32.mrb[0].mxu0
        %1601 = vmatprep.mubr.bf16.mxu0 0
        %1602 = vmatmul.mubr.bf16.gmra.mrb[0].mxu0 %v1431
        %v1603 = vpop.f32.mrb[0].mxu0
        %v1604 = vadd.f32 %v1479, %v1603
        %v1605 = vpop.f32.mrb[0].mxu0
        %v1606 = vpop.f32.mrb[0].mxu0
        %v1607 = vadd.f32 %v1479, %v1606
        %v1608 = vpop.f32.mrb[0].mxu0
        %1609 = vmatprep.mubr.bf16.mxu0 0
        %1610 = vmatmul.mubr.bf16.gmra.mrb[0].mxu0 %v1432
        %v1611 = vpop.f32.mrb[0].mxu0
        %v1612 = vadd.f32 %v1479, %v1611
        %v1613 = vpop.f32.mrb[0].mxu0
        %v1614 = vpop.f32.mrb[0].mxu0
        %v1615 = vadd.f32 %v1479, %v1614
        %v1616 = vpop.f32.mrb[0].mxu0
        %1617 = vmatprep.mubr.bf16.mxu0 0
        %1618 = vmatmul.mubr.bf16.gmra.mrb[0].mxu0 %v1433
        %v1619 = vpop.f32.mrb[0].mxu0
        %v1620 = vadd.f32 %v1479, %v1619
        %v1621 = vpop.f32.mrb[0].mxu0
        %v1622 = vpop.f32.mrb[0].mxu0
        %v1623 = vadd.f32 %v1479, %v1622
        %v1624 = vpop.f32.mrb[0].mxu0
        %1625 = vmatprep.mubr.bf16.mxu0 0
        %1626 = vmatmul.mubr.bf16.gmra.mrb[0].mxu0 %v1434
        %v1627 = vpop.f32.mrb[0].mxu0
        %v1628 = vadd.f32 %v1479, %v1627
        %v1629 = vpop.f32.mrb[0].mxu0
        %v1630 = vpop.f32.mrb[0].mxu0
        %v1631 = vadd.f32 %v1479, %v1630
        %v1632 = vpop.f32.mrb[0].mxu0
        %1633 = vmatprep.mubr.bf16.mxu0 0
        %1634 = vmatmul.mubr.bf16.gmra.mrb[0].mxu0 %v1435
        %v1635 = vpop.f32.mrb[0].mxu0
        %v1636 = vadd.f32 %v1479, %v1635
        %v1637 = vpop.f32.mrb[0].mxu0
        %v1638 = vpop.f32.mrb[0].mxu0
        %v1639 = vadd.f32 %v1479, %v1638
        %v1640 = vpop.f32.mrb[0].mxu0
        %1641 = vmatprep.mubr.bf16.mxu0 0
        %1642 = vmatmul.mubr.bf16.gmra.mrb[0].mxu0 %v1436
        %v1643 = vpop.f32.mrb[0].mxu0
        %v1644 = vadd.f32 %v1479, %v1643
        %v1645 = vpop.f32.mrb[0].mxu0
        %v1646 = vpop.f32.mrb[0].mxu0
        %v1647 = vadd.f32 %v1479, %v1646
        %v1648 = vpop.f32.mrb[0].mxu0
        %1649 = vmatprep.mubr.bf16.mxu0 0
        %1650 = vmatmul.mubr.bf16.gmra.mrb[0].mxu0 %v1437
        %v1651 = vpop.f32.mrb[0].mxu0
        %v1652 = vadd.f32 %v1479, %v1651
        %v1653 = vpop.f32.mrb[0].mxu0
        %v1654 = vpop.f32.mrb[0].mxu0
        %v1655 = vadd.f32 %v1479, %v1654
        %v1656 = vpop.f32.mrb[0].mxu0
        %1657 = vmatprep.mubr.bf16.mxu0 0
        %1658 = vmatmul.mubr.bf16.gmra.mrb[0].mxu0 %v1438
        %v1659 = vpop.f32.mrb[0].mxu0
        %v1660 = vadd.f32 %v1479, %v1659
        %v1661 = vpop.f32.mrb[0].mxu0
        %v1662 = vpop.f32.mrb[0].mxu0
        %v1663 = vadd.f32 %v1479, %v1662
        %v1664 = vpop.f32.mrb[0].mxu0
        %1665 = vmatprep.mubr.bf16.mxu0 0
        %1666 = vmatmul.mubr.bf16.gmra.mrb[0].mxu0 %v1439
        %v1667 = vpop.f32.mrb[0].mxu0
        %v1668 = vadd.f32 %v1479, %v1667
        %v1669 = vpop.f32.mrb[0].mxu0
        %v1670 = vpop.f32.mrb[0].mxu0
        %v1671 = vadd.f32 %v1479, %v1670
        %v1672 = vpop.f32.mrb[0].mxu0
        %1673 = vmatprep.mubr.bf16.mxu0 0
        %1674 = vmatmul.mubr.bf16.gmra.mrb[0].mxu0 %v1440
        %v1675 = vpop.f32.mrb[0].mxu0
        %v1676 = vadd.f32 %v1479, %v1675
        %v1677 = vpop.f32.mrb[0].mxu0
        %v1678 = vpop.f32.mrb[0].mxu0
        %v1679 = vadd.f32 %v1479, %v1678
        %v1680 = vpop.f32.mrb[0].mxu0
        %1681 = vmatprep.mubr.bf16.mxu0 0
        %1682 = vmatmul.mubr.bf16.gmra.mrb[0].mxu0 %v1441
        %v1683 = vpop.f32.mrb[0].mxu0
        %v1684 = vadd.f32 %v1479, %v1683
        %v1685 = vpop.f32.mrb[0].mxu0
        %v1686 = vpop.f32.mrb[0].mxu0
        %v1687 = vadd.f32 %v1479, %v1686
        %v1688 = vpop.f32.mrb[0].mxu0
        %1689 = vmatprep.mubr.bf16.mxu0 0
        %1690 = vmatmul.mubr.bf16.gmra.mrb[0].mxu0 %v1442
        %v1691 = vpop.f32.mrb[0].mxu0
        %v1692 = vadd.f32 %v1479, %v1691
        %v1693 = vpop.f32.mrb[0].mxu0
        %v1694 = vpop.f32.mrb[0].mxu0
        %v1695 = vadd.f32 %v1479, %v1694
        %v1696 = vpop.f32.mrb[0].mxu0
        %1697 = vmatprep.mubr.bf16.mxu0 0
        %1698 = vmatmul.mubr.bf16.gmra.mrb[0].mxu0 %v1443
        %v1699 = vpop.f32.mrb[0].mxu0
        %v1700 = vadd.f32 %v1479, %v1699
        %v1701 = vpop.f32.mrb[0].mxu0
        %v1702 = vpop.f32.mrb[0].mxu0
        %v1703 = vadd.f32 %v1479, %v1702
        %v1704 = vpop.f32.mrb[0].mxu0
        %1705 = vmatprep.mubr.bf16.mxu0 0
        %1706 = vmatmul.mubr.bf16.gmra.mrb[0].mxu0 %v1444
        %v1707 = vpop.f32.mrb[0].mxu0
        %v1708 = vadd.f32 %v1479, %v1707
        %v1709 = vpop.f32.mrb[0].mxu0
        %v1710 = vpop.f32.mrb[0].mxu0
        %v1711 = vadd.f32 %v1479, %v1710
        %v1712 = vpop.f32.mrb[0].mxu0
        %1713 = vmatprep.mubr.bf16.mxu0 0
        %1714 = vmatmul.mubr.bf16.gmra.mrb[0].mxu0 %v1445
        %v1715 = vpop.f32.mrb[0].mxu0
        %v1716 = vadd.f32 %v1479, %v1715
        %v1717 = vpop.f32.mrb[0].mxu0
        %v1718 = vpop.f32.mrb[0].mxu0
        %v1719 = vadd.f32 %v1479, %v1718
        %v1720 = vpop.f32.mrb[0].mxu0
        %1721 = vmatprep.mubr.bf16.mxu0 0
        %1722 = vmatmul.mubr.bf16.gmra.mrb[0].mxu0 %v1446
        %v1723 = vpop.f32.mrb[0].mxu0
        %v1724 = vadd.f32 %v1479, %v1723
        %v1725 = vpop.f32.mrb[0].mxu0
        %v1726 = vpop.f32.mrb[0].mxu0
        %v1727 = vadd.f32 %v1479, %v1726
        %v1728 = vpop.f32.mrb[0].mxu0
        %1729 = vmatprep.mubr.bf16.mxu0 0
        %1730 = vmatmul.mubr.bf16.gmra.mrb[0].mxu0 %v1447
        %v1731 = vpop.f32.mrb[0].mxu0
        %v1732 = vadd.f32 %v1479, %v1731
        %v1733 = vpop.f32.mrb[0].mxu0
        %v1734 = vpop.f32.mrb[0].mxu0
        %v1735 = vadd.f32 %v1479, %v1734
        %v1736 = vpop.f32.mrb[0].mxu0
        %1737 = vmatprep.mubr.bf16.mxu0 0
        %1738 = vmatmul.mubr.bf16.gmra.mrb[0].mxu0 %v1448
        %v1739 = vpop.f32.mrb[0].mxu0
        %v1740 = vadd.f32 %v1479, %v1739
        %v1741 = vpop.f32.mrb[0].mxu0
        %v1742 = vpop.f32.mrb[0].mxu0
        %v1743 = vadd.f32 %v1479, %v1742
        %v1744 = vpop.f32.mrb[0].mxu0
        %1745 = vmatprep.mubr.bf16.mxu0 0
        %1746 = vmatmul.mubr.bf16.gmra.mrb[0].mxu0 %v1449
        %v1747 = vpop.f32.mrb[0].mxu0
        %v1748 = vadd.f32 %v1479, %v1747
        %v1749 = vpop.f32.mrb[0].mxu0
        %v1750 = vpop.f32.mrb[0].mxu0
        %v1751 = vadd.f32 %v1479, %v1750
        %v1752 = vpop.f32.mrb[0].mxu0
        %1753 = vmatprep.mubr.bf16.mxu0 0
        %1754 = vmatmul.mubr.bf16.gmra.mrb[0].mxu0 %v1450
        %v1755 = vpop.f32.mrb[0].mxu0
        %v1756 = vadd.f32 %v1479, %v1755
        %v1757 = vpop.f32.mrb[0].mxu0
        %v1758 = vpop.f32.mrb[0].mxu0
        %v1759 = vadd.f32 %v1479, %v1758
        %v1760 = vpop.f32.mrb[0].mxu0
        %1761 = vmatprep.mubr.bf16.mxu0 0
        %1762 = vmatmul.mubr.bf16.gmra.mrb[0].mxu0 %v1451
        %v1763 = vpop.f32.mrb[0].mxu0
        %v1764 = vadd.f32 %v1479, %v1763
        %v1765 = vpop.f32.mrb[0].mxu0
        %v1766 = vpop.f32.mrb[0].mxu0
        %v1767 = vadd.f32 %v1479, %v1766
        %v1768 = vpop.f32.mrb[0].mxu0
        %1769 = vmatprep.mubr.bf16.mxu0 0
        %1770 = vmatmul.mubr.bf16.gmra.mrb[0].mxu0 %v1452
        %v1771 = vpop.f32.mrb[0].mxu0
        %v1772 = vadd.f32 %v1479, %v1771
        %v1773 = vpop.f32.mrb[0].mxu0
        %v1774 = vpop.f32.mrb[0].mxu0
        %v1775 = vadd.f32 %v1479, %v1774
        %v1776 = vpop.f32.mrb[0].mxu0
        %1777 = vmatprep.mubr.bf16.mxu0 0
        %1778 = vmatmul.mubr.bf16.gmra.mrb[0].mxu0 %v1453
        %v1779 = vpop.f32.mrb[0].mxu0
        %v1780 = vadd.f32 %v1479, %v1779
        %v1781 = vpop.f32.mrb[0].mxu0
        %v1782 = vpop.f32.mrb[0].mxu0
        %v1783 = vadd.f32 %v1479, %v1782
        %v1784 = vpop.f32.mrb[0].mxu0
        %1785 = vmatprep.mubr.bf16.mxu0 0
        %1786 = vmatmul.mubr.bf16.gmra.mrb[0].mxu0 %v1454
        %v1787 = vpop.f32.mrb[0].mxu0
        %v1788 = vadd.f32 %v1479, %v1787
        %v1789 = vpop.f32.mrb[0].mxu0
        %v1790 = vpop.f32.mrb[0].mxu0
        %v1791 = vadd.f32 %v1479, %v1790
        %v1792 = vpop.f32.mrb[0].mxu0
        %1793 = vmatprep.mubr.bf16.mxu0 0
        %1794 = vmatmul.mubr.bf16.gmra.mrb[0].mxu0 %v1455
        %v1795 = vpop.f32.mrb[0].mxu0
        %v1796 = vadd.f32 %v1479, %v1795
        %v1797 = vpop.f32.mrb[0].mxu0
        %v1798 = vpop.f32.mrb[0].mxu0
        %v1799 = vadd.f32 %v1479, %v1798
        %v1800 = vpop.f32.mrb[0].mxu0
        %1801 = vmatprep.mubr.bf16.mxu0 0
        %1802 = vmatmul.mubr.bf16.gmra.mrb[0].mxu0 %v1456
        %v1803 = vpop.f32.mrb[0].mxu0
        %v1804 = vadd.f32 %v1479, %v1803
        %v1805 = vpop.f32.mrb[0].mxu0
        %v1806 = vpop.f32.mrb[0].mxu0
        %v1807 = vadd.f32 %v1479, %v1806
        %v1808 = vpop.f32.mrb[0].mxu0
        %1809 = vmatprep.mubr.bf16.mxu0 0
        %1810 = vmatmul.mubr.bf16.gmra.mrb[0].mxu0 %v1457
        %v1811 = vpop.f32.mrb[0].mxu0
        %v1812 = vadd.f32 %v1479, %v1811
        %v1813 = vpop.f32.mrb[0].mxu0
        %v1814 = vpop.f32.mrb[0].mxu0
        %v1815 = vadd.f32 %v1479, %v1814
        %v1816 = vpop.f32.mrb[0].mxu0
        %1817 = vdwg.mxu0
        %1818 = vst [vmem:[%s272] sm:$0xff] %v1564
        %1819 = vst [vmem:[%s272 + $0x8] sm:$0xff] %v1567
        %1820 = vst [vmem:[%s272 + $0x10] sm:$0xff] %v1572
        %1821 = vst [vmem:[%s272 + $0x18] sm:$0xff] %v1575
        %1822 = vst [vmem:[%s272 + $0x20] sm:$0xff] %v1580
        %1823 = vst [vmem:[%s272 + $0x28] sm:$0xff] %v1583
        %1824 = vst [vmem:[%s272 + $0x30] sm:$0xff] %v1588
        %1825 = vst [vmem:[%s272 + $0x38] sm:$0xff] %v1591
        %1826 = vst [vmem:[%s272 + $0x40] sm:$0xff] %v1596
        %1827 = vst [vmem:[%s272 + $0x48] sm:$0xff] %v1599
        %1828 = vst [vmem:[%s272 + $0x50] sm:$0xff] %v1604
        %1829 = vst [vmem:[%s272 + $0x58] sm:$0xff] %v1607
        %1830 = vst [vmem:[%s272 + $0x60] sm:$0xff] %v1612
        %1831 = vst [vmem:[%s272 + $0x68] sm:$0xff] %v1615
        %1832 = vst [vmem:[%s272 + $0x70] sm:$0xff] %v1620
        %1833 = vst [vmem:[%s272 + $0x78] sm:$0xff] %v1623
        %1834 = vst [vmem:[%s272 + $0x80] sm:$0xff] %v1628
        %1835 = vst [vmem:[%s272 + $0x88] sm:$0xff] %v1631
        %1836 = vst [vmem:[%s272 + $0x90] sm:$0xff] %v1636
        %1837 = vst [vmem:[%s272 + $0x98] sm:$0xff] %v1639
        %1838 = vst [vmem:[%s272 + $0xa0] sm:$0xff] %v1644
        %1839 = vst [vmem:[%s272 + $0xa8] sm:$0xff] %v1647
        %1840 = vst [vmem:[%s272 + $0xb0] sm:$0xff] %v1652
        %1841 = vst [vmem:[%s272 + $0xb8] sm:$0xff] %v1655
        %1842 = vst [vmem:[%s272 + $0xc0] sm:$0xff] %v1660
        %1843 = vst [vmem:[%s272 + $0xc8] sm:$0xff] %v1663
        %1844 = vst [vmem:[%s272 + $0xd0] sm:$0xff] %v1668
        %1845 = vst [vmem:[%s272 + $0xd8] sm:$0xff] %v1671
        %1846 = vst [vmem:[%s272 + $0xe0] sm:$0xff] %v1676
        %1847 = vst [vmem:[%s272 + $0xe8] sm:$0xff] %v1679
        %1848 = vst [vmem:[%s272 + $0xf0] sm:$0xff] %v1684
        %1849 = vst [vmem:[%s272 + $0xf8] sm:$0xff] %v1687
        %1850 = vst [vmem:[%s272 + $0x100] sm:$0xff] %v1692
        %1851 = vst [vmem:[%s272 + $0x108] sm:$0xff] %v1695
        %1852 = vst [vmem:[%s272 + $0x110] sm:$0xff] %v1700
        %1853 = vst [vmem:[%s272 + $0x118] sm:$0xff] %v1703
        %1854 = vst [vmem:[%s272 + $0x120] sm:$0xff] %v1708
        %1855 = vst [vmem:[%s272 + $0x128] sm:$0xff] %v1711
        %1856 = vst [vmem:[%s272 + $0x130] sm:$0xff] %v1716
        %1857 = vst [vmem:[%s272 + $0x138] sm:$0xff] %v1719
        %1858 = vst [vmem:[%s272 + $0x140] sm:$0xff] %v1724
        %1859 = vst [vmem:[%s272 + $0x148] sm:$0xff] %v1727
        %1860 = vst [vmem:[%s272 + $0x150] sm:$0xff] %v1732
        %1861 = vst [vmem:[%s272 + $0x158] sm:$0xff] %v1735
        %1862 = vst [vmem:[%s272 + $0x160] sm:$0xff] %v1740
        %1863 = vst [vmem:[%s272 + $0x168] sm:$0xff] %v1743
        %1864 = vst [vmem:[%s272 + $0x170] sm:$0xff] %v1748
        %1865 = vst [vmem:[%s272 + $0x178] sm:$0xff] %v1751
        %1866 = vst [vmem:[%s272 + $0x180] sm:$0xff] %v1756
        %1867 = vst [vmem:[%s272 + $0x188] sm:$0xff] %v1759
        %1868 = vst [vmem:[%s272 + $0x190] sm:$0xff] %v1764
        %1869 = vst [vmem:[%s272 + $0x198] sm:$0xff] %v1767
        %1870 = vst [vmem:[%s272 + $0x1a0] sm:$0xff] %v1772
        %1871 = vst [vmem:[%s272 + $0x1a8] sm:$0xff] %v1775
        %1872 = vst [vmem:[%s272 + $0x1b0] sm:$0xff] %v1780
        %1873 = vst [vmem:[%s272 + $0x1b8] sm:$0xff] %v1783
        %1874 = vst [vmem:[%s272 + $0x1c0] sm:$0xff] %v1788
        %1875 = vst [vmem:[%s272 + $0x1c8] sm:$0xff] %v1791
        %1876 = vst [vmem:[%s272 + $0x1d0] sm:$0xff] %v1796
        %1877 = vst [vmem:[%s272 + $0x1d8] sm:$0xff] %v1799
        %1878 = vst [vmem:[%s272 + $0x1e0] sm:$0xff] %v1804
        %1879 = vst [vmem:[%s272 + $0x1e8] sm:$0xff] %v1807
        %1880 = vst [vmem:[%s272 + $0x1f0] sm:$0xff] %v1812
        %1881 = vst [vmem:[%s272 + $0x1f8] sm:$0xff] %v1815
        %s1882 = sand.u32 %s181, 1
        %s1883 = scalar_lea.sflag [#allocation3], %s1882
        %s1884 = sand.u32 %s181, 1
        %s1885 = smul.addr %s1884, 512
        %s1886 = scalar_lea.vmem [#allocation2], %s1885
        // Predicated region
        $region49: #{tpu_custom_call.1} parent=47 // pred_check
          %p1887 = pneg %p191
        $region50: #{tpu_custom_call.1} parent=47 // pred_check_branch
          %1889 = sbr.rel (%p1887) target = $region52
        $region51: #{tpu_custom_call.1} parent=47 // pred_region
          %s1890 = smul.u32 64, %s21
          %s1892 = ssub.s32 8192, 8192
          %1893 = vsyncadd %s1883, %s1892
          %s1894 = smul.addr %s1890, 128
          %s1895 = scalar_lea.hbm %s7, %s1894
          %s1896 = sshll.u32 %s1886, 4
          %s1897 = int_to_ptr.vmem [resolvable:$true] %s1896
          %1902 = dma.vmem_to_hbm [thread:$0]  %s1897, 8192, %s1895, %s1883, 128, 128, 8
        $region52: #{tpu_custom_call.1} parent=47 // pred_fallthru
          _
      $region48: #{tpu_custom_call.1} parent=5 // pred_fallthru
        _
      %p1903 = scmp.le.s32.totalorder 2, %s16
      // Predicated region
      $region53: #{tpu_custom_call.1} parent=5 // pred_check
        %p1904 = pneg %p1903
      $region54: #{tpu_custom_call.1} parent=5 // pred_check_branch
        %1906 = sbr.rel (%p1904) target = $region56
      $region55: #{tpu_custom_call.1} parent=5 // pred_region
        %s1907 = ssub.s32 %s16, 2
        // Predicated region
        $region57: #{tpu_custom_call.1} parent=55 // pred_check
          %p1908 = pneg %p197
        $region58: #{tpu_custom_call.1} parent=55 // pred_check_branch
          %1910 = sbr.rel (%p1908) target = $region60
        $region59: #{tpu_custom_call.1} parent=55 // pred_region
          %s1911 = sand.u32 %s182, 1
          %s1912 = scalar_lea.sflag [#allocation3], %s1911
          %s1913 = sand.u32 %s182, 1
          %s1914 = smul.addr %s1913, 512
          %s1915 = scalar_lea.vmem [#allocation2], %s1914
          %1916 = dma.done %s1912, 8192
        $region60: #{tpu_custom_call.1} parent=55 // pred_fallthru
          _
      $region56: #{tpu_custom_call.1} parent=5 // pred_fallthru
        _
    $region6: #{tpu_custom_call.1} parent=1 // loop_footer
      %s20 = sadd.s32 1, %s16
    $region7: #{tpu_custom_call.1} parent=1 // loop_footer_branch
      %15 = sbr.rel target = $region3
    $region8: #{tpu_custom_call.1} parent=1 // loop_exit
      _
    %1917 = vsyncpa [#allocation3], 1
    %s1918 = scalar_lea.sflag [#allocation3], 1
    %1919 = vsyncpa %s1918, 1

</llo_original>
